<compile_context>
chip_gen: v6e
topology: v6e:2x2x1
jax: 0.10.0
libtpu: 0.0.40
codegen_flags: <defaults>
</compile_context>

<pallas_src>
import jax
import jax.numpy as jnp
from jax.experimental import pallas as pl
from jax.experimental.pallas import tpu as pltpu  # noqa: F401 (no scratch needed)

INPUT_SIZE = 28
HIDDEN = 64
OUT_DIM = 10


def lstm_kernel(x_ref, w_ih_ref, w_hh_ref, b_ref, w_out_ref, b_out_ref,
                out_ref):
    """Whole LSTM forward + final Linear in one invocation.

    x_ref:     (T*B, IN)  time-major flattened inputs (row = t*B + b)
    w_ih_ref:  (IN, 4H)   input->gates weights (pre-transposed, g cols *2)
    w_hh_ref:  (H, 4H)    hidden->gates weights (pre-transposed, g cols *2)
    b_ref:     (1, 4H)    combined bias b_ih + b_hh (g cols *2)
    w_out_ref: (H, OUT)   final linear weights (pre-transposed)
    b_out_ref: (1, OUT)   final linear bias
    out_ref:   (B, OUT)   logits from the last timestep's hidden state
    """
    TB, IN = x_ref.shape
    H = w_hh_ref.shape[0]
    B = out_ref.shape[0]
    T = TB // B

    # ---- Hoisted input projection: ONE (T*B, IN) @ (IN, 4H) MXU matmul. ----
    # No recurrent dependency, so all T timesteps are projected at once and
    # the bias add moves out of the serial loop.  gi stays in vregs (8 vregs
    # for (32, 256) f32) -- no VMEM scratch round trip.
    gi = jnp.dot(x_ref[...], w_ih_ref[...],
                 preferred_element_type=jnp.float32) + b_ref[...]

    w_hh = w_hh_ref[...]

    h = jnp.zeros((B, H), jnp.float32)
    c = jnp.zeros((B, H), jnp.float32)

    # ---- Recurrence: fully unrolled (T small & static) -> straight-line ----
    # code for the LLO scheduler; only h @ W_hh + one sigmoid pass sit on the
    # serial chain.
    for t in range(T):
        gates = gi[t * B:(t + 1) * B, :] + jnp.dot(
            h, w_hh, preferred_element_type=jnp.float32)       # (B, 4H)

        # Single full-width sigmoid on the EUP.  g-gate columns were
        # pre-scaled by 2 in the wrapper, so tanh(z_g) = 2*sigmoid(2*z_g) - 1.
        # PyTorch gate order: (i, f, g, o).
        sg = jax.nn.sigmoid(gates)
        i_g = sg[:, 0 * H:1 * H]
        f_g = sg[:, 1 * H:2 * H]
        g_g = 2.0 * sg[:, 2 * H:3 * H] - 1.0
        o_g = sg[:, 3 * H:4 * H]

        c = f_g * c + i_g * g_g
        # tanh(c) = 2*sigmoid(2c) - 1: 1 EUP vreg + 2 VPU ops (vs tanh pass).
        h = o_g * (2.0 * jax.nn.sigmoid(2.0 * c) - 1.0)

    # Final Linear on the last hidden state.
    out_ref[...] = (jnp.dot(h, w_out_ref[...],
                            preferred_element_type=jnp.float32)
                    + b_out_ref[...]).astype(out_ref.dtype)


@jax.jit
def rnn_forward(x, w_ih_t, w_hh_t, b, w_out_t, b_out):
    B, T, IN = x.shape
    H = w_hh_t.shape[0]

    # Pre-scale the g-gate columns (2H:3H) by 2 so the kernel only needs
    # sigmoids (tanh(z) = 2*sigmoid(2z) - 1).  Tiny one-shot XLA ops.
    g_scale = jnp.ones((1, 4 * H), jnp.float32).at[:, 2 * H:3 * H].set(2.0)
    w_ih_s = w_ih_t * g_scale
    w_hh_s = w_hh_t * g_scale
    b_s = b * g_scale

    # Trivial (3.5 KB) transpose+flatten so gi is built time-major and each
    # step reads a contiguous row block.
    x_tm = jnp.transpose(x, (1, 0, 2)).reshape(T * B, IN)

    # Gridless call: every operand lives whole in VMEM, no tiling needed.
    # TODO(synk): on v7x with a large real batch, add a leading batch grid
    # axis marked "parallel" to shard the recurrence across both TensorCores.
    return pl.pallas_call(
        lstm_kernel,
        out_shape=jax.ShapeDtypeStruct((B, OUT_DIM), x.dtype),
    )(x_tm, w_ih_s, w_hh_s, b_s, w_out_t, b_out)


def _reference(x, w_ih_t, w_hh_t, b, w_out_t, b_out):
    """Pure-JAX LSTM reference (PyTorch gate order i, f, g, o), unscaled."""
    B, T, _ = x.shape
    H = w_hh_t.shape[0]
    h = jnp.zeros((B, H), jnp.float32)
    c = jnp.zeros((B, H), jnp.float32)
    for t in range(T):
        gates = x[:, t, :] @ w_ih_t + h @ w_hh_t + b
        i = jax.nn.sigmoid(gates[:, 0 * H:1 * H])
        f = jax.nn.sigmoid(gates[:, 1 * H:2 * H])
        g = jnp.tanh(gates[:, 2 * H:3 * H])
        o = jax.nn.sigmoid(gates[:, 3 * H:4 * H])
        c = f * c + i * g
        h = o * jnp.tanh(c)
    return h @ w_out_t + b_out


if __name__ == "__main__":
    B, T, IN, H = 4, 8, INPUT_SIZE, HIDDEN

    key = jax.random.PRNGKey(0)
    kx, k1, k2, k3, k4, k5, k6 = jax.random.split(key, 7)

    # Deterministic parameter init, mirroring PyTorch's U(-1/sqrt(H), 1/sqrt(H)).
    s = 1.0 / jnp.sqrt(jnp.float32(H))
    w_ih_t = jax.random.uniform(k1, (IN, 4 * H), jnp.float32, -s, s)   # = W_ih^T
    w_hh_t = jax.random.uniform(k2, (H, 4 * H), jnp.float32, -s, s)    # = W_hh^T
    b_ih = jax.random.uniform(k3, (4 * H,), jnp.float32, -s, s)
    b_hh = jax.random.uniform(k4, (4 * H,), jnp.float32, -s, s)
    b = (b_ih + b_hh).reshape(1, 4 * H)
    w_out_t = jax.random.uniform(k5, (H, OUT_DIM), jnp.float32, -s, s)  # Linear W^T
    b_out = jax.random.uniform(k6, (OUT_DIM,), jnp.float32, -s, s).reshape(1, OUT_DIM)

    x = jax.random.normal(kx, (B, T, IN), jnp.float32)

    out = rnn_forward(x, w_ih_t, w_hh_t, b, w_out_t, b_out)
    out = jax.block_until_ready(out)
    assert out.shape == (B, OUT_DIM)

    ref = _reference(x, w_ih_t, w_hh_t, b, w_out_t, b_out)
    assert jnp.allclose(out, ref, atol=2e-4, rtol=2e-4)

    print("KERNEL_OK")
</pallas_src>

<mosaic_0001>
module attributes {stable_mosaic.version = 11 : i64} {
  func.func @lstm_kernel(%arg0: memref<32x28xf32, #tpu.memory_space<vmem>>, %arg1: memref<28x256xf32, #tpu.memory_space<vmem>>, %arg2: memref<64x256xf32, #tpu.memory_space<vmem>>, %arg3: memref<1x256xf32, #tpu.memory_space<vmem>>, %arg4: memref<64x10xf32, #tpu.memory_space<vmem>>, %arg5: memref<1x10xf32, #tpu.memory_space<vmem>>, %arg6: memref<4x10xf32, #tpu.memory_space<vmem>>) attributes {dimension_semantics = [], scalar_prefetch = 0 : i64, scratch_operands = 0 : i64, tpu.core_type = #tpu.core_type<tc>} {
    %c0 = arith.constant 0 : index
    %c0_0 = arith.constant 0 : index
    %0 = vector.load %arg0[%c0, %c0_0] : memref<32x28xf32, #tpu.memory_space<vmem>>, vector<32x28xf32>
    %c0_1 = arith.constant 0 : index
    %c0_2 = arith.constant 0 : index
    %1 = vector.load %arg1[%c0_1, %c0_2] : memref<28x256xf32, #tpu.memory_space<vmem>>, vector<28x256xf32>
    %cst = arith.constant dense<0.000000e+00> : vector<32x256xf32>
    %2 = tpu.matmul %0, %1, %cst {dimension_numbers = #tpu.dot_dimension_numbers<[1], [0], [0], [1], [0, 0, 1, 1], [], []>} : vector<32x28xf32>, vector<28x256xf32>, vector<32x256xf32> -> vector<32x256xf32>
    %c0_3 = arith.constant 0 : index
    %c0_4 = arith.constant 0 : index
    %3 = vector.load %arg3[%c0_3, %c0_4] : memref<1x256xf32, #tpu.memory_space<vmem>>, vector<1x256xf32>
    %4 = vector.broadcast %3 : vector<1x256xf32> to vector<32x256xf32>
    %5 = arith.addf %2, %4 : vector<32x256xf32>
    %c0_5 = arith.constant 0 : index
    %c0_6 = arith.constant 0 : index
    %6 = vector.load %arg2[%c0_5, %c0_6] : memref<64x256xf32, #tpu.memory_space<vmem>>, vector<64x256xf32>
    %cst_7 = arith.constant 0.000000e+00 : f32
    %7 = vector.broadcast %cst_7 : f32 to vector<4x64xf32>
    %cst_8 = arith.constant 0.000000e+00 : f32
    %8 = vector.broadcast %cst_8 : f32 to vector<4x64xf32>
    %9 = vector.extract_strided_slice %5 {offsets = [0, 0], sizes = [4, 256], strides = [1, 1]} : vector<32x256xf32> to vector<4x256xf32>
    %cst_9 = arith.constant dense<0.000000e+00> : vector<4x256xf32>
    %10 = tpu.matmul %7, %6, %cst_9 {dimension_numbers = #tpu.dot_dimension_numbers<[1], [0], [0], [1], [0, 0, 1, 1], [], []>} : vector<4x64xf32>, vector<64x256xf32>, vector<4x256xf32> -> vector<4x256xf32>
    %11 = arith.addf %9, %10 : vector<4x256xf32>
    %12 = arith.negf %11 : vector<4x256xf32>
    %13 = math.exp %12 : vector<4x256xf32>
    %cst_10 = arith.constant 1.000000e+00 : f32
    %14 = vector.broadcast %cst_10 : f32 to vector<4x256xf32>
    %15 = arith.addf %14, %13 : vector<4x256xf32>
    %16 = arith.divf %14, %15 : vector<4x256xf32>
    %17 = vector.extract_strided_slice %16 {offsets = [0, 0], sizes = [4, 64], strides = [1, 1]} : vector<4x256xf32> to vector<4x64xf32>
    %18 = vector.extract_strided_slice %16 {offsets = [0, 64], sizes = [4, 64], strides = [1, 1]} : vector<4x256xf32> to vector<4x64xf32>
    %19 = vector.extract_strided_slice %16 {offsets = [0, 128], sizes = [4, 64], strides = [1, 1]} : vector<4x256xf32> to vector<4x64xf32>
    %cst_11 = arith.constant 2.000000e+00 : f32
    %20 = vector.broadcast %cst_11 : f32 to vector<4x64xf32>
    %21 = arith.mulf %20, %19 : vector<4x64xf32>
    %cst_12 = arith.constant 1.000000e+00 : f32
    %22 = vector.broadcast %cst_12 : f32 to vector<4x64xf32>
    %23 = arith.subf %21, %22 : vector<4x64xf32>
    %24 = vector.extract_strided_slice %16 {offsets = [0, 192], sizes = [4, 64], strides = [1, 1]} : vector<4x256xf32> to vector<4x64xf32>
    %25 = arith.mulf %18, %8 : vector<4x64xf32>
    %26 = arith.mulf %17, %23 : vector<4x64xf32>
    %27 = arith.addf %25, %26 : vector<4x64xf32>
    %cst_13 = arith.constant 2.000000e+00 : f32
    %28 = vector.broadcast %cst_13 : f32 to vector<4x64xf32>
    %29 = arith.mulf %28, %27 : vector<4x64xf32>
    %30 = arith.negf %29 : vector<4x64xf32>
    %31 = math.exp %30 : vector<4x64xf32>
    %cst_14 = arith.constant 1.000000e+00 : f32
    %32 = vector.broadcast %cst_14 : f32 to vector<4x64xf32>
    %33 = arith.addf %32, %31 : vector<4x64xf32>
    %34 = arith.divf %32, %33 : vector<4x64xf32>
    %cst_15 = arith.constant 2.000000e+00 : f32
    %35 = vector.broadcast %cst_15 : f32 to vector<4x64xf32>
    %36 = arith.mulf %35, %34 : vector<4x64xf32>
    %cst_16 = arith.constant 1.000000e+00 : f32
    %37 = vector.broadcast %cst_16 : f32 to vector<4x64xf32>
    %38 = arith.subf %36, %37 : vector<4x64xf32>
    %39 = arith.mulf %24, %38 : vector<4x64xf32>
    %40 = vector.extract_strided_slice %5 {offsets = [4, 0], sizes = [4, 256], strides = [1, 1]} : vector<32x256xf32> to vector<4x256xf32>
    %cst_17 = arith.constant dense<0.000000e+00> : vector<4x256xf32>
    %41 = tpu.matmul %39, %6, %cst_17 {dimension_numbers = #tpu.dot_dimension_numbers<[1], [0], [0], [1], [0, 0, 1, 1], [], []>} : vector<4x64xf32>, vector<64x256xf32>, vector<4x256xf32> -> vector<4x256xf32>
    %42 = arith.addf %40, %41 : vector<4x256xf32>
    %43 = arith.negf %42 : vector<4x256xf32>
    %44 = math.exp %43 : vector<4x256xf32>
    %cst_18 = arith.constant 1.000000e+00 : f32
    %45 = vector.broadcast %cst_18 : f32 to vector<4x256xf32>
    %46 = arith.addf %45, %44 : vector<4x256xf32>
    %47 = arith.divf %45, %46 : vector<4x256xf32>
    %48 = vector.extract_strided_slice %47 {offsets = [0, 0], sizes = [4, 64], strides = [1, 1]} : vector<4x256xf32> to vector<4x64xf32>
    %49 = vector.extract_strided_slice %47 {offsets = [0, 64], sizes = [4, 64], strides = [1, 1]} : vector<4x256xf32> to vector<4x64xf32>
    %50 = vector.extract_strided_slice %47 {offsets = [0, 128], sizes = [4, 64], strides = [1, 1]} : vector<4x256xf32> to vector<4x64xf32>
    %cst_19 = arith.constant 2.000000e+00 : f32
    %51 = vector.broadcast %cst_19 : f32 to vector<4x64xf32>
    %52 = arith.mulf %51, %50 : vector<4x64xf32>
    %cst_20 = arith.constant 1.000000e+00 : f32
    %53 = vector.broadcast %cst_20 : f32 to vector<4x64xf32>
    %54 = arith.subf %52, %53 : vector<4x64xf32>
    %55 = vector.extract_strided_slice %47 {offsets = [0, 192], sizes = [4, 64], strides = [1, 1]} : vector<4x256xf32> to vector<4x64xf32>
    %56 = arith.mulf %49, %27 : vector<4x64xf32>
    %57 = arith.mulf %48, %54 : vector<4x64xf32>
    %58 = arith.addf %56, %57 : vector<4x64xf32>
    %cst_21 = arith.constant 2.000000e+00 : f32
    %59 = vector.broadcast %cst_21 : f32 to vector<4x64xf32>
    %60 = arith.mulf %59, %58 : vector<4x64xf32>
    %61 = arith.negf %60 : vector<4x64xf32>
    %62 = math.exp %61 : vector<4x64xf32>
    %cst_22 = arith.constant 1.000000e+00 : f32
    %63 = vector.broadcast %cst_22 : f32 to vector<4x64xf32>
    %64 = arith.addf %63, %62 : vector<4x64xf32>
    %65 = arith.divf %63, %64 : vector<4x64xf32>
    %cst_23 = arith.constant 2.000000e+00 : f32
    %66 = vector.broadcast %cst_23 : f32 to vector<4x64xf32>
    %67 = arith.mulf %66, %65 : vector<4x64xf32>
    %cst_24 = arith.constant 1.000000e+00 : f32
    %68 = vector.broadcast %cst_24 : f32 to vector<4x64xf32>
    %69 = arith.subf %67, %68 : vector<4x64xf32>
    %70 = arith.mulf %55, %69 : vector<4x64xf32>
    %71 = vector.extract_strided_slice %5 {offsets = [8, 0], sizes = [4, 256], strides = [1, 1]} : vector<32x256xf32> to vector<4x256xf32>
    %cst_25 = arith.constant dense<0.000000e+00> : vector<4x256xf32>
    %72 = tpu.matmul %70, %6, %cst_25 {dimension_numbers = #tpu.dot_dimension_numbers<[1], [0], [0], [1], [0, 0, 1, 1], [], []>} : vector<4x64xf32>, vector<64x256xf32>, vector<4x256xf32> -> vector<4x256xf32>
    %73 = arith.addf %71, %72 : vector<4x256xf32>
    %74 = arith.negf %73 : vector<4x256xf32>
    %75 = math.exp %74 : vector<4x256xf32>
    %cst_26 = arith.constant 1.000000e+00 : f32
    %76 = vector.broadcast %cst_26 : f32 to vector<4x256xf32>
    %77 = arith.addf %76, %75 : vector<4x256xf32>
    %78 = arith.divf %76, %77 : vector<4x256xf32>
    %79 = vector.extract_strided_slice %78 {offsets = [0, 0], sizes = [4, 64], strides = [1, 1]} : vector<4x256xf32> to vector<4x64xf32>
    %80 = vector.extract_strided_slice %78 {offsets = [0, 64], sizes = [4, 64], strides = [1, 1]} : vector<4x256xf32> to vector<4x64xf32>
    %81 = vector.extract_strided_slice %78 {offsets = [0, 128], sizes = [4, 64], strides = [1, 1]} : vector<4x256xf32> to vector<4x64xf32>
    %cst_27 = arith.constant 2.000000e+00 : f32
    %82 = vector.broadcast %cst_27 : f32 to vector<4x64xf32>
    %83 = arith.mulf %82, %81 : vector<4x64xf32>
    %cst_28 = arith.constant 1.000000e+00 : f32
    %84 = vector.broadcast %cst_28 : f32 to vector<4x64xf32>
    %85 = arith.subf %83, %84 : vector<4x64xf32>
    %86 = vector.extract_strided_slice %78 {offsets = [0, 192], sizes = [4, 64], strides = [1, 1]} : vector<4x256xf32> to vector<4x64xf32>
    %87 = arith.mulf %80, %58 : vector<4x64xf32>
    %88 = arith.mulf %79, %85 : vector<4x64xf32>
    %89 = arith.addf %87, %88 : vector<4x64xf32>
    %cst_29 = arith.constant 2.000000e+00 : f32
    %90 = vector.broadcast %cst_29 : f32 to vector<4x64xf32>
    %91 = arith.mulf %90, %89 : vector<4x64xf32>
    %92 = arith.negf %91 : vector<4x64xf32>
    %93 = math.exp %92 : vector<4x64xf32>
    %cst_30 = arith.constant 1.000000e+00 : f32
    %94 = vector.broadcast %cst_30 : f32 to vector<4x64xf32>
    %95 = arith.addf %94, %93 : vector<4x64xf32>
    %96 = arith.divf %94, %95 : vector<4x64xf32>
    %cst_31 = arith.constant 2.000000e+00 : f32
    %97 = vector.broadcast %cst_31 : f32 to vector<4x64xf32>
    %98 = arith.mulf %97, %96 : vector<4x64xf32>
    %cst_32 = arith.constant 1.000000e+00 : f32
    %99 = vector.broadcast %cst_32 : f32 to vector<4x64xf32>
    %100 = arith.subf %98, %99 : vector<4x64xf32>
    %101 = arith.mulf %86, %100 : vector<4x64xf32>
    %102 = vector.extract_strided_slice %5 {offsets = [12, 0], sizes = [4, 256], strides = [1, 1]} : vector<32x256xf32> to vector<4x256xf32>
    %cst_33 = arith.constant dense<0.000000e+00> : vector<4x256xf32>
    %103 = tpu.matmul %101, %6, %cst_33 {dimension_numbers = #tpu.dot_dimension_numbers<[1], [0], [0], [1], [0, 0, 1, 1], [], []>} : vector<4x64xf32>, vector<64x256xf32>, vector<4x256xf32> -> vector<4x256xf32>
    %104 = arith.addf %102, %103 : vector<4x256xf32>
    %105 = arith.negf %104 : vector<4x256xf32>
    %106 = math.exp %105 : vector<4x256xf32>
    %cst_34 = arith.constant 1.000000e+00 : f32
    %107 = vector.broadcast %cst_34 : f32 to vector<4x256xf32>
    %108 = arith.addf %107, %106 : vector<4x256xf32>
    %109 = arith.divf %107, %108 : vector<4x256xf32>
    %110 = vector.extract_strided_slice %109 {offsets = [0, 0], sizes = [4, 64], strides = [1, 1]} : vector<4x256xf32> to vector<4x64xf32>
    %111 = vector.extract_strided_slice %109 {offsets = [0, 64], sizes = [4, 64], strides = [1, 1]} : vector<4x256xf32> to vector<4x64xf32>
    %112 = vector.extract_strided_slice %109 {offsets = [0, 128], sizes = [4, 64], strides = [1, 1]} : vector<4x256xf32> to vector<4x64xf32>
    %cst_35 = arith.constant 2.000000e+00 : f32
    %113 = vector.broadcast %cst_35 : f32 to vector<4x64xf32>
    %114 = arith.mulf %113, %112 : vector<4x64xf32>
    %cst_36 = arith.constant 1.000000e+00 : f32
    %115 = vector.broadcast %cst_36 : f32 to vector<4x64xf32>
    %116 = arith.subf %114, %115 : vector<4x64xf32>
    %117 = vector.extract_strided_slice %109 {offsets = [0, 192], sizes = [4, 64], strides = [1, 1]} : vector<4x256xf32> to vector<4x64xf32>
    %118 = arith.mulf %111, %89 : vector<4x64xf32>
    %119 = arith.mulf %110, %116 : vector<4x64xf32>
    %120 = arith.addf %118, %119 : vector<4x64xf32>
    %cst_37 = arith.constant 2.000000e+00 : f32
    %121 = vector.broadcast %cst_37 : f32 to vector<4x64xf32>
    %122 = arith.mulf %121, %120 : vector<4x64xf32>
    %123 = arith.negf %122 : vector<4x64xf32>
    %124 = math.exp %123 : vector<4x64xf32>
    %cst_38 = arith.constant 1.000000e+00 : f32
    %125 = vector.broadcast %cst_38 : f32 to vector<4x64xf32>
    %126 = arith.addf %125, %124 : vector<4x64xf32>
    %127 = arith.divf %125, %126 : vector<4x64xf32>
    %cst_39 = arith.constant 2.000000e+00 : f32
    %128 = vector.broadcast %cst_39 : f32 to vector<4x64xf32>
    %129 = arith.mulf %128, %127 : vector<4x64xf32>
    %cst_40 = arith.constant 1.000000e+00 : f32
    %130 = vector.broadcast %cst_40 : f32 to vector<4x64xf32>
    %131 = arith.subf %129, %130 : vector<4x64xf32>
    %132 = arith.mulf %117, %131 : vector<4x64xf32>
    %133 = vector.extract_strided_slice %5 {offsets = [16, 0], sizes = [4, 256], strides = [1, 1]} : vector<32x256xf32> to vector<4x256xf32>
    %cst_41 = arith.constant dense<0.000000e+00> : vector<4x256xf32>
    %134 = tpu.matmul %132, %6, %cst_41 {dimension_numbers = #tpu.dot_dimension_numbers<[1], [0], [0], [1], [0, 0, 1, 1], [], []>} : vector<4x64xf32>, vector<64x256xf32>, vector<4x256xf32> -> vector<4x256xf32>
    %135 = arith.addf %133, %134 : vector<4x256xf32>
    %136 = arith.negf %135 : vector<4x256xf32>
    %137 = math.exp %136 : vector<4x256xf32>
    %cst_42 = arith.constant 1.000000e+00 : f32
    %138 = vector.broadcast %cst_42 : f32 to vector<4x256xf32>
    %139 = arith.addf %138, %137 : vector<4x256xf32>
    %140 = arith.divf %138, %139 : vector<4x256xf32>
    %141 = vector.extract_strided_slice %140 {offsets = [0, 0], sizes = [4, 64], strides = [1, 1]} : vector<4x256xf32> to vector<4x64xf32>
    %142 = vector.extract_strided_slice %140 {offsets = [0, 64], sizes = [4, 64], strides = [1, 1]} : vector<4x256xf32> to vector<4x64xf32>
    %143 = vector.extract_strided_slice %140 {offsets = [0, 128], sizes = [4, 64], strides = [1, 1]} : vector<4x256xf32> to vector<4x64xf32>
    %cst_43 = arith.constant 2.000000e+00 : f32
    %144 = vector.broadcast %cst_43 : f32 to vector<4x64xf32>
    %145 = arith.mulf %144, %143 : vector<4x64xf32>
    %cst_44 = arith.constant 1.000000e+00 : f32
    %146 = vector.broadcast %cst_44 : f32 to vector<4x64xf32>
    %147 = arith.subf %145, %146 : vector<4x64xf32>
    %148 = vector.extract_strided_slice %140 {offsets = [0, 192], sizes = [4, 64], strides = [1, 1]} : vector<4x256xf32> to vector<4x64xf32>
    %149 = arith.mulf %142, %120 : vector<4x64xf32>
    %150 = arith.mulf %141, %147 : vector<4x64xf32>
    %151 = arith.addf %149, %150 : vector<4x64xf32>
    %cst_45 = arith.constant 2.000000e+00 : f32
    %152 = vector.broadcast %cst_45 : f32 to vector<4x64xf32>
    %153 = arith.mulf %152, %151 : vector<4x64xf32>
    %154 = arith.negf %153 : vector<4x64xf32>
    %155 = math.exp %154 : vector<4x64xf32>
    %cst_46 = arith.constant 1.000000e+00 : f32
    %156 = vector.broadcast %cst_46 : f32 to vector<4x64xf32>
    %157 = arith.addf %156, %155 : vector<4x64xf32>
    %158 = arith.divf %156, %157 : vector<4x64xf32>
    %cst_47 = arith.constant 2.000000e+00 : f32
    %159 = vector.broadcast %cst_47 : f32 to vector<4x64xf32>
    %160 = arith.mulf %159, %158 : vector<4x64xf32>
    %cst_48 = arith.constant 1.000000e+00 : f32
    %161 = vector.broadcast %cst_48 : f32 to vector<4x64xf32>
    %162 = arith.subf %160, %161 : vector<4x64xf32>
    %163 = arith.mulf %148, %162 : vector<4x64xf32>
    %164 = vector.extract_strided_slice %5 {offsets = [20, 0], sizes = [4, 256], strides = [1, 1]} : vector<32x256xf32> to vector<4x256xf32>
    %cst_49 = arith.constant dense<0.000000e+00> : vector<4x256xf32>
    %165 = tpu.matmul %163, %6, %cst_49 {dimension_numbers = #tpu.dot_dimension_numbers<[1], [0], [0], [1], [0, 0, 1, 1], [], []>} : vector<4x64xf32>, vector<64x256xf32>, vector<4x256xf32> -> vector<4x256xf32>
    %166 = arith.addf %164, %165 : vector<4x256xf32>
    %167 = arith.negf %166 : vector<4x256xf32>
    %168 = math.exp %167 : vector<4x256xf32>
    %cst_50 = arith.constant 1.000000e+00 : f32
    %169 = vector.broadcast %cst_50 : f32 to vector<4x256xf32>
    %170 = arith.addf %169, %168 : vector<4x256xf32>
    %171 = arith.divf %169, %170 : vector<4x256xf32>
    %172 = vector.extract_strided_slice %171 {offsets = [0, 0], sizes = [4, 64], strides = [1, 1]} : vector<4x256xf32> to vector<4x64xf32>
    %173 = vector.extract_strided_slice %171 {offsets = [0, 64], sizes = [4, 64], strides = [1, 1]} : vector<4x256xf32> to vector<4x64xf32>
    %174 = vector.extract_strided_slice %171 {offsets = [0, 128], sizes = [4, 64], strides = [1, 1]} : vector<4x256xf32> to vector<4x64xf32>
    %cst_51 = arith.constant 2.000000e+00 : f32
    %175 = vector.broadcast %cst_51 : f32 to vector<4x64xf32>
    %176 = arith.mulf %175, %174 : vector<4x64xf32>
    %cst_52 = arith.constant 1.000000e+00 : f32
    %177 = vector.broadcast %cst_52 : f32 to vector<4x64xf32>
    %178 = arith.subf %176, %177 : vector<4x64xf32>
    %179 = vector.extract_strided_slice %171 {offsets = [0, 192], sizes = [4, 64], strides = [1, 1]} : vector<4x256xf32> to vector<4x64xf32>
    %180 = arith.mulf %173, %151 : vector<4x64xf32>
    %181 = arith.mulf %172, %178 : vector<4x64xf32>
    %182 = arith.addf %180, %181 : vector<4x64xf32>
    %cst_53 = arith.constant 2.000000e+00 : f32
    %183 = vector.broadcast %cst_53 : f32 to vector<4x64xf32>
    %184 = arith.mulf %183, %182 : vector<4x64xf32>
    %185 = arith.negf %184 : vector<4x64xf32>
    %186 = math.exp %185 : vector<4x64xf32>
    %cst_54 = arith.constant 1.000000e+00 : f32
    %187 = vector.broadcast %cst_54 : f32 to vector<4x64xf32>
    %188 = arith.addf %187, %186 : vector<4x64xf32>
    %189 = arith.divf %187, %188 : vector<4x64xf32>
    %cst_55 = arith.constant 2.000000e+00 : f32
    %190 = vector.broadcast %cst_55 : f32 to vector<4x64xf32>
    %191 = arith.mulf %190, %189 : vector<4x64xf32>
    %cst_56 = arith.constant 1.000000e+00 : f32
    %192 = vector.broadcast %cst_56 : f32 to vector<4x64xf32>
    %193 = arith.subf %191, %192 : vector<4x64xf32>
    %194 = arith.mulf %179, %193 : vector<4x64xf32>
    %195 = vector.extract_strided_slice %5 {offsets = [24, 0], sizes = [4, 256], strides = [1, 1]} : vector<32x256xf32> to vector<4x256xf32>
    %cst_57 = arith.constant dense<0.000000e+00> : vector<4x256xf32>
    %196 = tpu.matmul %194, %6, %cst_57 {dimension_numbers = #tpu.dot_dimension_numbers<[1], [0], [0], [1], [0, 0, 1, 1], [], []>} : vector<4x64xf32>, vector<64x256xf32>, vector<4x256xf32> -> vector<4x256xf32>
    %197 = arith.addf %195, %196 : vector<4x256xf32>
    %198 = arith.negf %197 : vector<4x256xf32>
    %199 = math.exp %198 : vector<4x256xf32>
    %cst_58 = arith.constant 1.000000e+00 : f32
    %200 = vector.broadcast %cst_58 : f32 to vector<4x256xf32>
    %201 = arith.addf %200, %199 : vector<4x256xf32>
    %202 = arith.divf %200, %201 : vector<4x256xf32>
    %203 = vector.extract_strided_slice %202 {offsets = [0, 0], sizes = [4, 64], strides = [1, 1]} : vector<4x256xf32> to vector<4x64xf32>
    %204 = vector.extract_strided_slice %202 {offsets = [0, 64], sizes = [4, 64], strides = [1, 1]} : vector<4x256xf32> to vector<4x64xf32>
    %205 = vector.extract_strided_slice %202 {offsets = [0, 128], sizes = [4, 64], strides = [1, 1]} : vector<4x256xf32> to vector<4x64xf32>
    %cst_59 = arith.constant 2.000000e+00 : f32
    %206 = vector.broadcast %cst_59 : f32 to vector<4x64xf32>
    %207 = arith.mulf %206, %205 : vector<4x64xf32>
    %cst_60 = arith.constant 1.000000e+00 : f32
    %208 = vector.broadcast %cst_60 : f32 to vector<4x64xf32>
    %209 = arith.subf %207, %208 : vector<4x64xf32>
    %210 = vector.extract_strided_slice %202 {offsets = [0, 192], sizes = [4, 64], strides = [1, 1]} : vector<4x256xf32> to vector<4x64xf32>
    %211 = arith.mulf %204, %182 : vector<4x64xf32>
    %212 = arith.mulf %203, %209 : vector<4x64xf32>
    %213 = arith.addf %211, %212 : vector<4x64xf32>
    %cst_61 = arith.constant 2.000000e+00 : f32
    %214 = vector.broadcast %cst_61 : f32 to vector<4x64xf32>
    %215 = arith.mulf %214, %213 : vector<4x64xf32>
    %216 = arith.negf %215 : vector<4x64xf32>
    %217 = math.exp %216 : vector<4x64xf32>
    %cst_62 = arith.constant 1.000000e+00 : f32
    %218 = vector.broadcast %cst_62 : f32 to vector<4x64xf32>
    %219 = arith.addf %218, %217 : vector<4x64xf32>
    %220 = arith.divf %218, %219 : vector<4x64xf32>
    %cst_63 = arith.constant 2.000000e+00 : f32
    %221 = vector.broadcast %cst_63 : f32 to vector<4x64xf32>
    %222 = arith.mulf %221, %220 : vector<4x64xf32>
    %cst_64 = arith.constant 1.000000e+00 : f32
    %223 = vector.broadcast %cst_64 : f32 to vector<4x64xf32>
    %224 = arith.subf %222, %223 : vector<4x64xf32>
    %225 = arith.mulf %210, %224 : vector<4x64xf32>
    %226 = vector.extract_strided_slice %5 {offsets = [28, 0], sizes = [4, 256], strides = [1, 1]} : vector<32x256xf32> to vector<4x256xf32>
    %cst_65 = arith.constant dense<0.000000e+00> : vector<4x256xf32>
    %227 = tpu.matmul %225, %6, %cst_65 {dimension_numbers = #tpu.dot_dimension_numbers<[1], [0], [0], [1], [0, 0, 1, 1], [], []>} : vector<4x64xf32>, vector<64x256xf32>, vector<4x256xf32> -> vector<4x256xf32>
    %228 = arith.addf %226, %227 : vector<4x256xf32>
    %229 = arith.negf %228 : vector<4x256xf32>
    %230 = math.exp %229 : vector<4x256xf32>
    %cst_66 = arith.constant 1.000000e+00 : f32
    %231 = vector.broadcast %cst_66 : f32 to vector<4x256xf32>
    %232 = arith.addf %231, %230 : vector<4x256xf32>
    %233 = arith.divf %231, %232 : vector<4x256xf32>
    %234 = vector.extract_strided_slice %233 {offsets = [0, 0], sizes = [4, 64], strides = [1, 1]} : vector<4x256xf32> to vector<4x64xf32>
    %235 = vector.extract_strided_slice %233 {offsets = [0, 64], sizes = [4, 64], strides = [1, 1]} : vector<4x256xf32> to vector<4x64xf32>
    %236 = vector.extract_strided_slice %233 {offsets = [0, 128], sizes = [4, 64], strides = [1, 1]} : vector<4x256xf32> to vector<4x64xf32>
    %cst_67 = arith.constant 2.000000e+00 : f32
    %237 = vector.broadcast %cst_67 : f32 to vector<4x64xf32>
    %238 = arith.mulf %237, %236 : vector<4x64xf32>
    %cst_68 = arith.constant 1.000000e+00 : f32
    %239 = vector.broadcast %cst_68 : f32 to vector<4x64xf32>
    %240 = arith.subf %238, %239 : vector<4x64xf32>
    %241 = vector.extract_strided_slice %233 {offsets = [0, 192], sizes = [4, 64], strides = [1, 1]} : vector<4x256xf32> to vector<4x64xf32>
    %242 = arith.mulf %235, %213 : vector<4x64xf32>
    %243 = arith.mulf %234, %240 : vector<4x64xf32>
    %244 = arith.addf %242, %243 : vector<4x64xf32>
    %cst_69 = arith.constant 2.000000e+00 : f32
    %245 = vector.broadcast %cst_69 : f32 to vector<4x64xf32>
    %246 = arith.mulf %245, %244 : vector<4x64xf32>
    %247 = arith.negf %246 : vector<4x64xf32>
    %248 = math.exp %247 : vector<4x64xf32>
    %cst_70 = arith.constant 1.000000e+00 : f32
    %249 = vector.broadcast %cst_70 : f32 to vector<4x64xf32>
    %250 = arith.addf %249, %248 : vector<4x64xf32>
    %251 = arith.divf %249, %250 : vector<4x64xf32>
    %cst_71 = arith.constant 2.000000e+00 : f32
    %252 = vector.broadcast %cst_71 : f32 to vector<4x64xf32>
    %253 = arith.mulf %252, %251 : vector<4x64xf32>
    %cst_72 = arith.constant 1.000000e+00 : f32
    %254 = vector.broadcast %cst_72 : f32 to vector<4x64xf32>
    %255 = arith.subf %253, %254 : vector<4x64xf32>
    %256 = arith.mulf %241, %255 : vector<4x64xf32>
    %c0_73 = arith.constant 0 : index
    %c0_74 = arith.constant 0 : index
    %257 = vector.load %arg4[%c0_73, %c0_74] : memref<64x10xf32, #tpu.memory_space<vmem>>, vector<64x10xf32>
    %cst_75 = arith.constant dense<0.000000e+00> : vector<4x10xf32>
    %258 = tpu.matmul %256, %257, %cst_75 {dimension_numbers = #tpu.dot_dimension_numbers<[1], [0], [0], [1], [0, 0, 1, 1], [], []>} : vector<4x64xf32>, vector<64x10xf32>, vector<4x10xf32> -> vector<4x10xf32>
    %c0_76 = arith.constant 0 : index
    %c0_77 = arith.constant 0 : index
    %259 = vector.load %arg5[%c0_76, %c0_77] : memref<1x10xf32, #tpu.memory_space<vmem>>, vector<1x10xf32>
    %260 = vector.broadcast %259 : vector<1x10xf32> to vector<4x10xf32>
    %261 = arith.addf %258, %260 : vector<4x10xf32>
    %c0_78 = arith.constant 0 : index
    %c0_79 = arith.constant 0 : index
    %262 = vector.load %arg6[%c0_78, %c0_79] : memref<4x10xf32, #tpu.memory_space<vmem>>, vector<4x10xf32>
    tpu.vector_store %arg6[%c0_78, %c0_79], %261 {strides = array<i32>} : memref<4x10xf32, #tpu.memory_space<vmem>>, vector<4x10xf32>,
    return
  }
}

</mosaic_0001>

<llo_original>
// kernel: mul.17
$region0: #{mul.17}
  #allocation0 [shape = 's32[1]{0}', space=sflag, size = 0x4, scoped, tag = 'scoped memory for mul.17']
  %s0 = inlined_call_operand.vmem [shape: f32[1,256], index: 0, kind: input, shape index: {}]
  %s1 = inlined_call_operand.vmem [shape: f32[1,256], index: 1, kind: input, shape index: {}]
  %s2 = inlined_call_operand.vmem [shape: f32[1,256], index: 2, kind: output, shape index: {}]
  %v3 = vld [vmem:[%s0] sm:$0x1]
  %v4 = vld [vmem:[%s1] sm:$0x1]
  %5 = xla_tuple %v3, %v4
  %6 = xla_tuple %5
  %v7 = vmul.f32 %v3, %v4
  %8 = xla_tuple %v7
  %9 = vst [vmem:[%s2] sm:$0x1] %v7
  %s10 = scalar_lea.vmem %s0, 1
  %v11 = vld [vmem:[%s10] sm:$0x1]
  %s12 = scalar_lea.vmem %s1, 1
  %v13 = vld [vmem:[%s12] sm:$0x1]
  %14 = xla_tuple %v11, %v13
  %15 = xla_tuple %14
  %v16 = vmul.f32 %v11, %v13
  %17 = xla_tuple %v16
  %s18 = scalar_lea.vmem %s2, 1
  %19 = vst [vmem:[%s18] sm:$0x1] %v16

// kernel: rnn_forward.1
$region0: #{rnn_forward.1}
  #allocation0 [shape = 'u32[]', space=smem, size = 0x4, offset = 0x4, fixed_abs, tag = 'smem constant byte address 0x4 - core index']
  #allocation1 [shape = 'u32[144,128]{1,0:T(1,128)}', space=vmem, size = 0x12000, scoped, tag = 'internal scratch']
  %s0 = inlined_call_operand.vmem [shape: f32[32,28], index: 0, kind: input, shape index: {}]
  %s1 = inlined_call_operand.vmem [shape: f32[28,256], index: 1, kind: input, shape index: {}]
  %s2 = inlined_call_operand.vmem [shape: f32[64,256], index: 2, kind: input, shape index: {}]
  %s3 = inlined_call_operand.vmem [shape: f32[1,256], index: 3, kind: input, shape index: {}]
  %s4 = inlined_call_operand.vmem [shape: f32[64,10], index: 4, kind: input, shape index: {}]
  %s5 = inlined_call_operand.vmem [shape: f32[1,10], index: 5, kind: input, shape index: {}]
  %s6 = inlined_call_operand.hbm [shape: f32[4,10], index: 6, kind: output, shape index: {}]
  %s7 = sld [smem:[#allocation0]]
  $region34: #{rnn_forward.1} parent=0
    _
  %s9 = ssub.s32 1, %s7
  %s10 = scalar_select 0, %s9, %s7
  $region1: #{rnn_forward.1} parent=0
    #allocation2 [shape = 'u8[2048]{0}', space=vmem, size = 0x800, scoped, tag = 'output window, operand 0, single buffered']
    #allocation3 [shape = 's32[1]{0}', space=sflag, size = 0x4, scoped, tag = 'scoped memory for rnn_forward.1']
    %11 = vsyncpa [#allocation3], 0
    // Predicated region
    $region2: #{rnn_forward.1} parent=1 // pred_check
      _
    $region3: #{rnn_forward.1} parent=1 // pred_check_branch
      %13 = sbr.rel (0) target = $region5
    $region4: #{rnn_forward.1} parent=1 // pred_region
      _
    $region5: #{rnn_forward.1} parent=1 // pred_fallthru
      _
    // Predicated region
    $region6: #{rnn_forward.1} parent=1 // pred_check
      _
    $region7: #{rnn_forward.1} parent=1 // pred_check_branch
      %15 = sbr.rel (0) target = $region9
    $region8: #{rnn_forward.1} parent=1 // pred_region
      _
    $region9: #{rnn_forward.1} parent=1 // pred_fallthru
      _
    // Predicated region
    $region10: #{rnn_forward.1} parent=1 // pred_check
      _
    $region11: #{rnn_forward.1} parent=1 // pred_check_branch
      %17 = sbr.rel (0) target = $region13
    $region12: #{rnn_forward.1} parent=1 // pred_region
      _
    $region13: #{rnn_forward.1} parent=1 // pred_fallthru
      _
    // Predicated region
    $region14: #{rnn_forward.1} parent=1 // pred_check
      _
    $region15: #{rnn_forward.1} parent=1 // pred_check_branch
      %19 = sbr.rel (0) target = $region17
    $region16: #{rnn_forward.1} parent=1 // pred_region
      _
    $region17: #{rnn_forward.1} parent=1 // pred_fallthru
      _
    // Predicated region
    $region18: #{rnn_forward.1} parent=1 // pred_check
      _
    $region19: #{rnn_forward.1} parent=1 // pred_check_branch
      %21 = sbr.rel (0) target = $region21
    $region20: #{rnn_forward.1} parent=1 // pred_region
      _
    $region21: #{rnn_forward.1} parent=1 // pred_fallthru
      _
    // Predicated region
    $region22: #{rnn_forward.1} parent=1 // pred_check
      _
    $region23: #{rnn_forward.1} parent=1 // pred_check_branch
      %23 = sbr.rel (0) target = $region25
    $region24: #{rnn_forward.1} parent=1 // pred_region
      _
    $region25: #{rnn_forward.1} parent=1 // pred_fallthru
      _
    %v24 = vld [vmem:[%s0] sm:$0xff]
    %v25 = vld [vmem:[%s0 + $0x8] sm:$0xff]
    %v26 = vld [vmem:[%s0 + $0x10] sm:$0xff]
    %v27 = vld [vmem:[%s0 + $0x18] sm:$0xff]
    %v28 = vld [vmem:[%s1] sm:$0xff]
    %v29 = vld [vmem:[%s1 + $0x8] sm:$0xff]
    %v30 = vld [vmem:[%s1 + $0x10] sm:$0xff]
    %v31 = vld [vmem:[%s1 + $0x18] sm:$0xff]
    %v32 = vld [vmem:[%s1 + $0x20] sm:$0xff]
    %v33 = vld [vmem:[%s1 + $0x28] sm:$0xff]
    %v34 = vld [vmem:[%s1 + $0x30] sm:$0xf]
    %v35 = vld [vmem:[%s1 + $0x38] sm:$0xf]
    %v36 = vld [vmem:[%s3] sm:$0x3]
    %v38 = vlaneseq
    %v39 = vshrl.u32 %v38, 7
    %v40 = vsub.s32 0, %v39
    %v41 = vrot.slane %v36, %v40
    %v42 = vlaneseq
    %v43 = vshrl.u32 %v42, 7
    %v44 = vsub.s32 1, %v43
    %v45 = vrot.slane %v36, %v44
    %vm48 = vcmask 228352
    %v50 = vsel %vm48, %v24, 0
    %v53 = vsel %vm48, %v25, 0
    %v56 = vsel %vm48, %v26, 0
    %v59 = vsel %vm48, %v27, 0
    %vm61 = vcmask 1043456
    %v63 = vsel %vm61, %v34, 0
    %v66 = vsel %vm61, %v35, 0
    %68 = vmatprep.subr.mxu0 0.0
    %69 = vmatpush1.msra.mxu0 0.0
    %70 = vmatprep.subr.mxu0 0.0
    %71 = vmatpush1.msra.mxu0 0.0
    %72 = vmatprep.subr.mxu0 0.0
    %73 = vmatpush1.msra.mxu0 0.0
    %74 = vmatprep.subr.mxu0 0.0
    %75 = vmatpush1.msra.mxu0 0.0
    %76 = vmatprep.subr.mxu0 0.0
    %77 = vmatpush1.msra.mxu0 0.0
    %78 = vmatprep.subr.mxu0 0.0
    %79 = vmatpush1.msra.mxu0 0.0
    %80 = vmatprep.subr.mxu0 0.0
    %81 = vmatpush1.msra.mxu0 0.0
    %82 = vmatprep.subr.mxu0 0.0
    %83 = vmatpush1.msra.mxu0 0.0
    %84 = vmatprep.subr.mxu0 0.0
    %85 = vmatpush1.msra.mxu0 0.0
    %86 = vmatprep.subr.mxu0 0.0
    %87 = vmatpush1.msra.mxu0 0.0
    %88 = vmatprep.subr.mxu0 0.0
    %89 = vmatpush1.msra.mxu0 0.0
    %90 = vmatprep.subr.mxu0 0.0
    %91 = vmatpush1.msra.mxu0 0.0
    %92 = vmatprep.subr.mxu0 %v66
    %93 = vmatpush1.msra.mxu0 %v63
    %94 = vmatprep.subr.mxu0 %v33
    %95 = vmatpush1.msra.mxu0 %v32
    %96 = vmatprep.subr.mxu0 %v31
    %97 = vmatpush1.msra.mxu0 %v30
    %98 = vmatprep.subr.mxu0 %v29
    %99 = vmatpush1.msra.mxu0 %v28
    %100 = vmatprep.subr.mxu0 0.0
    %101 = vmatpush2.msra.mxu0 0.0
    %102 = vmatprep.subr.mxu0 0.0
    %103 = vmatpush2.msra.mxu0 0.0
    %104 = vmatprep.subr.mxu0 0.0
    %105 = vmatpush2.msra.mxu0 0.0
    %106 = vmatprep.subr.mxu0 0.0
    %107 = vmatpush2.msra.mxu0 0.0
    %108 = vmatprep.subr.mxu0 0.0
    %109 = vmatpush2.msra.mxu0 0.0
    %110 = vmatprep.subr.mxu0 0.0
    %111 = vmatpush2.msra.mxu0 0.0
    %112 = vmatprep.subr.mxu0 0.0
    %113 = vmatpush2.msra.mxu0 0.0
    %114 = vmatprep.subr.mxu0 0.0
    %115 = vmatpush2.msra.mxu0 0.0
    %116 = vmatprep.subr.mxu0 0.0
    %117 = vmatpush2.msra.mxu0 0.0
    %118 = vmatprep.subr.mxu0 0.0
    %119 = vmatpush2.msra.mxu0 0.0
    %120 = vmatprep.subr.mxu0 0.0
    %121 = vmatpush2.msra.mxu0 0.0
    %122 = vmatprep.subr.mxu0 0.0
    %123 = vmatpush2.msra.mxu0 0.0
    %124 = vmatprep.subr.mxu0 0.0
    %125 = vmatpush2.msra.mxu0 0.0
    %126 = vmatprep.subr.mxu0 0.0
    %127 = vmatpush2.msra.mxu0 0.0
    %128 = vmatprep.subr.mxu0 0.0
    %129 = vmatpush2.msra.mxu0 0.0
    %130 = vmatprep.subr.mxu0 0.0
    %131 = vmatpush2.msra.mxu0 0.0
    %132 = vmatprep.mubr.f32.mxu0 0.0
    %133 = vmatmul.mubr.f32.gmra.mxu0 %v50
    %v134 = vpop.f32.mrf.mxu0
    %v135 = vadd.f32 %v41, %v134
    %v136 = vpop.f32.mrf.mxu0
    %v137 = vadd.f32 %v45, %v136
    %138 = vmatprep.mubr.f32.mxu0 0.0
    %139 = vmatmul.mubr.f32.gmra.mxu0 %v53
    %v140 = vpop.f32.mrf.mxu0
    %v141 = vadd.f32 %v41, %v140
    %v142 = vpop.f32.mrf.mxu0
    %v143 = vadd.f32 %v45, %v142
    %144 = vmatprep.mubr.f32.mxu0 0.0
    %145 = vmatmul.mubr.f32.gmra.mxu0 %v56
    %v146 = vpop.f32.mrf.mxu0
    %v147 = vadd.f32 %v41, %v146
    %v148 = vpop.f32.mrf.mxu0
    %v149 = vadd.f32 %v45, %v148
    %150 = vmatprep.mubr.f32.mxu0 0.0
    %151 = vmatmul.mubr.f32.gmra.mxu0 %v59
    %v152 = vpop.f32.mrf.mxu0
    %v153 = vadd.f32 %v41, %v152
    %v154 = vpop.f32.mrf.mxu0
    %v155 = vadd.f32 %v45, %v154
    %156 = vdwg.mxu0
    %v157 = vld [vmem:[%s2] sm:$0xff]
    %v158 = vld [vmem:[%s2 + $0x8] sm:$0xff]
    %v159 = vld [vmem:[%s2 + $0x10] sm:$0xff]
    %v160 = vld [vmem:[%s2 + $0x18] sm:$0xff]
    %v161 = vld [vmem:[%s2 + $0x20] sm:$0xff]
    %v162 = vld [vmem:[%s2 + $0x28] sm:$0xff]
    %v163 = vld [vmem:[%s2 + $0x30] sm:$0xff]
    %v164 = vld [vmem:[%s2 + $0x38] sm:$0xff]
    %v165 = vld [vmem:[%s2 + $0x40] sm:$0xff]
    %v166 = vld [vmem:[%s2 + $0x48] sm:$0xff]
    %v167 = vld [vmem:[%s2 + $0x50] sm:$0xff]
    %v168 = vld [vmem:[%s2 + $0x58] sm:$0xff]
    %v169 = vld [vmem:[%s2 + $0x60] sm:$0xff]
    %v170 = vld [vmem:[%s2 + $0x68] sm:$0xff]
    %v171 = vld [vmem:[%s2 + $0x70] sm:$0xff]
    %v172 = vld [vmem:[%s2 + $0x78] sm:$0xff]
    %vm173 = vcmask 523264
    %v175 = vsel %vm173, 0.0, 0
    %177 = vmatprep.subr.mxu0 0.0
    %178 = vmatpush1.msra.mxu0 0.0
    %179 = vmatprep.subr.mxu0 0.0
    %180 = vmatpush1.msra.mxu0 0.0
    %181 = vmatprep.subr.mxu0 0.0
    %182 = vmatpush1.msra.mxu0 0.0
    %183 = vmatprep.subr.mxu0 0.0
    %184 = vmatpush1.msra.mxu0 0.0
    %185 = vmatprep.subr.mxu0 0.0
    %186 = vmatpush1.msra.mxu0 0.0
    %187 = vmatprep.subr.mxu0 0.0
    %188 = vmatpush1.msra.mxu0 0.0
    %189 = vmatprep.subr.mxu0 0.0
    %190 = vmatpush1.msra.mxu0 0.0
    %191 = vmatprep.subr.mxu0 0.0
    %192 = vmatpush1.msra.mxu0 0.0
    %193 = vmatprep.subr.mxu0 %v172
    %194 = vmatpush1.msra.mxu0 %v171
    %195 = vmatprep.subr.mxu0 %v170
    %196 = vmatpush1.msra.mxu0 %v169
    %197 = vmatprep.subr.mxu0 %v168
    %198 = vmatpush1.msra.mxu0 %v167
    %199 = vmatprep.subr.mxu0 %v166
    %200 = vmatpush1.msra.mxu0 %v165
    %201 = vmatprep.subr.mxu0 %v164
    %202 = vmatpush1.msra.mxu0 %v163
    %203 = vmatprep.subr.mxu0 %v162
    %204 = vmatpush1.msra.mxu0 %v161
    %205 = vmatprep.subr.mxu0 %v160
    %206 = vmatpush1.msra.mxu0 %v159
    %207 = vmatprep.subr.mxu0 %v158
    %208 = vmatpush1.msra.mxu0 %v157
    %209 = vmatprep.subr.mxu0 0.0
    %210 = vmatpush2.msra.mxu0 0.0
    %211 = vmatprep.subr.mxu0 0.0
    %212 = vmatpush2.msra.mxu0 0.0
    %213 = vmatprep.subr.mxu0 0.0
    %214 = vmatpush2.msra.mxu0 0.0
    %215 = vmatprep.subr.mxu0 0.0
    %216 = vmatpush2.msra.mxu0 0.0
    %217 = vmatprep.subr.mxu0 0.0
    %218 = vmatpush2.msra.mxu0 0.0
    %219 = vmatprep.subr.mxu0 0.0
    %220 = vmatpush2.msra.mxu0 0.0
    %221 = vmatprep.subr.mxu0 0.0
    %222 = vmatpush2.msra.mxu0 0.0
    %223 = vmatprep.subr.mxu0 0.0
    %224 = vmatpush2.msra.mxu0 0.0
    %225 = vmatprep.subr.mxu0 0.0
    %226 = vmatpush2.msra.mxu0 0.0
    %227 = vmatprep.subr.mxu0 0.0
    %228 = vmatpush2.msra.mxu0 0.0
    %229 = vmatprep.subr.mxu0 0.0
    %230 = vmatpush2.msra.mxu0 0.0
    %231 = vmatprep.subr.mxu0 0.0
    %232 = vmatpush2.msra.mxu0 0.0
    %233 = vmatprep.subr.mxu0 0.0
    %234 = vmatpush2.msra.mxu0 0.0
    %235 = vmatprep.subr.mxu0 0.0
    %236 = vmatpush2.msra.mxu0 0.0
    %237 = vmatprep.subr.mxu0 0.0
    %238 = vmatpush2.msra.mxu0 0.0
    %239 = vmatprep.subr.mxu0 0.0
    %240 = vmatpush2.msra.mxu0 0.0
    %241 = vmatprep.mubr.f32.mxu0 0.0
    %242 = vmatmul.mubr.f32.gmra.mxu0 %v175
    %v243 = vpop.f32.mrf.mxu0
    %v244 = vadd.f32 0.0, %v243
    %v245 = vpop.f32.mrf.mxu0
    %v246 = vadd.f32 0.0, %v245
    %247 = vdwg.mxu0
    %v248 = vadd.f32 %v135, %v244
    %v249 = vadd.f32 %v137, %v246
    %v250 = vxor.u32 %v248, 2147483648
    %v251 = vxor.u32 %v249, 2147483648
    %v252 = vmul.f32 %v250, 1.442695
    %v253 = vpow.pop %v252
    %v254 = vmul.f32 %v251, 1.442695
    %v255 = vpow.pop %v254
    %v256 = vadd.f32 %v253, 1.0
    %v257 = vadd.f32 %v255, 1.0
    %v258 = vrcp.pop %v256
    %v259 = vmul.f32 1.0, %v258
    %v260 = vrcp.pop %v257
    %v261 = vmul.f32 1.0, %v260
    %v262 = vmul.f32 %v261, 2.0
    %v263 = vsub.f32 %v262, 1.0
    %v264 = vmul.f32 %v259, 0.0
    %v265 = vmul.f32 %v259, %v263
    %267 = vrot.lane.b32.xlu0 %v265, 64
    %v268 = vpop.permute.xlu0 %267
    %v270 = vadd.f32 %v264, %v268
    %v271 = vmul.f32 %v270, 2.0
    %v272 = vxor.u32 %v271, 2147483648
    %v273 = vmul.f32 %v272, 1.442695
    %v274 = vpow.pop %v273
    %v275 = vadd.f32 %v274, 1.0
    %v276 = vrcp.pop %v275
    %v277 = vmul.f32 1.0, %v276
    %v278 = vmul.f32 %v277, 2.0
    %v279 = vsub.f32 %v278, 1.0
    %v280 = vmul.f32 %v261, %v279
    %282 = vrot.lane.b32.xlu0 %v280, 64
    %v283 = vpop.permute.xlu0 %282
    %v284 = vsel %vm173, %v283, 0
    %286 = vmatprep.subr.mxu0 0.0
    %287 = vmatpush1.msra.mxu0 0.0
    %288 = vmatprep.subr.mxu0 0.0
    %289 = vmatpush1.msra.mxu0 0.0
    %290 = vmatprep.subr.mxu0 0.0
    %291 = vmatpush1.msra.mxu0 0.0
    %292 = vmatprep.subr.mxu0 0.0
    %293 = vmatpush1.msra.mxu0 0.0
    %294 = vmatprep.subr.mxu0 0.0
    %295 = vmatpush1.msra.mxu0 0.0
    %296 = vmatprep.subr.mxu0 0.0
    %297 = vmatpush1.msra.mxu0 0.0
    %298 = vmatprep.subr.mxu0 0.0
    %299 = vmatpush1.msra.mxu0 0.0
    %300 = vmatprep.subr.mxu0 0.0
    %301 = vmatpush1.msra.mxu0 0.0
    %302 = vmatprep.subr.mxu0 %v172
    %303 = vmatpush1.msra.mxu0 %v171
    %304 = vmatprep.subr.mxu0 %v170
    %305 = vmatpush1.msra.mxu0 %v169
    %306 = vmatprep.subr.mxu0 %v168
    %307 = vmatpush1.msra.mxu0 %v167
    %308 = vmatprep.subr.mxu0 %v166
    %309 = vmatpush1.msra.mxu0 %v165
    %310 = vmatprep.subr.mxu0 %v164
    %311 = vmatpush1.msra.mxu0 %v163
    %312 = vmatprep.subr.mxu0 %v162
    %313 = vmatpush1.msra.mxu0 %v161
    %314 = vmatprep.subr.mxu0 %v160
    %315 = vmatpush1.msra.mxu0 %v159
    %316 = vmatprep.subr.mxu0 %v158
    %317 = vmatpush1.msra.mxu0 %v157
    %318 = vmatprep.subr.mxu0 0.0
    %319 = vmatpush2.msra.mxu0 0.0
    %320 = vmatprep.subr.mxu0 0.0
    %321 = vmatpush2.msra.mxu0 0.0
    %322 = vmatprep.subr.mxu0 0.0
    %323 = vmatpush2.msra.mxu0 0.0
    %324 = vmatprep.subr.mxu0 0.0
    %325 = vmatpush2.msra.mxu0 0.0
    %326 = vmatprep.subr.mxu0 0.0
    %327 = vmatpush2.msra.mxu0 0.0
    %328 = vmatprep.subr.mxu0 0.0
    %329 = vmatpush2.msra.mxu0 0.0
    %330 = vmatprep.subr.mxu0 0.0
    %331 = vmatpush2.msra.mxu0 0.0
    %332 = vmatprep.subr.mxu0 0.0
    %333 = vmatpush2.msra.mxu0 0.0
    %334 = vmatprep.subr.mxu0 0.0
    %335 = vmatpush2.msra.mxu0 0.0
    %336 = vmatprep.subr.mxu0 0.0
    %337 = vmatpush2.msra.mxu0 0.0
    %338 = vmatprep.subr.mxu0 0.0
    %339 = vmatpush2.msra.mxu0 0.0
    %340 = vmatprep.subr.mxu0 0.0
    %341 = vmatpush2.msra.mxu0 0.0
    %342 = vmatprep.subr.mxu0 0.0
    %343 = vmatpush2.msra.mxu0 0.0
    %344 = vmatprep.subr.mxu0 0.0
    %345 = vmatpush2.msra.mxu0 0.0
    %346 = vmatprep.subr.mxu0 0.0
    %347 = vmatpush2.msra.mxu0 0.0
    %348 = vmatprep.subr.mxu0 0.0
    %349 = vmatpush2.msra.mxu0 0.0
    %350 = vmatprep.mubr.f32.mxu0 0.0
    %351 = vmatmul.mubr.f32.gmra.mxu0 %v284
    %v352 = vpop.f32.mrf.mxu0
    %v353 = vadd.f32 0.0, %v352
    %v354 = vpop.f32.mrf.mxu0
    %v355 = vadd.f32 0.0, %v354
    %356 = vdwg.mxu0
    %v359 = vrot.slane %v353, 4
    %v360 = vrot.slane %v355, 4
    %v363 = vadd.f32 %v135, %v359
    %v364 = vadd.f32 %v137, %v360
    %v365 = vxor.u32 %v363, 2147483648
    %v366 = vxor.u32 %v364, 2147483648
    %v367 = vmul.f32 %v365, 1.442695
    %v368 = vpow.pop %v367
    %v369 = vmul.f32 %v366, 1.442695
    %v370 = vpow.pop %v369
    %v371 = vadd.f32 %v368, 1.0
    %v372 = vadd.f32 %v370, 1.0
    %v373 = vrcp.pop %v371
    %v374 = vmul.f32 1.0, %v373
    %v375 = vrcp.pop %v372
    %v376 = vmul.f32 1.0, %v375
    %v377 = vmul.f32 %v376, 2.0
    %v378 = vsub.f32 %v377, 1.0
    %v380 = vrot.slane %v270, 4
    %v382 = vmul.f32 %v374, %v380
    %v383 = vmul.f32 %v374, %v378
    %385 = vrot.lane.b32.xlu0 %v383, 64
    %v386 = vpop.permute.xlu0 %385
    %v388 = vadd.f32 %v382, %v386
    %v389 = vmul.f32 %v388, 2.0
    %v390 = vxor.u32 %v389, 2147483648
    %v391 = vmul.f32 %v390, 1.442695
    %v392 = vpow.pop %v391
    %v393 = vadd.f32 %v392, 1.0
    %v394 = vrcp.pop %v393
    %v395 = vmul.f32 1.0, %v394
    %v396 = vmul.f32 %v395, 2.0
    %v397 = vsub.f32 %v396, 1.0
    %v398 = vmul.f32 %v376, %v397
    %v400 = vrot.slane %v398, 4
    %401 = vrot.lane.b32.xlu0 %v400, 64
    %v402 = vpop.permute.xlu0 %401
    %v403 = vsel %vm173, %v402, 0
    %405 = vmatprep.subr.mxu0 0.0
    %406 = vmatpush1.msra.mxu0 0.0
    %407 = vmatprep.subr.mxu0 0.0
    %408 = vmatpush1.msra.mxu0 0.0
    %409 = vmatprep.subr.mxu0 0.0
    %410 = vmatpush1.msra.mxu0 0.0
    %411 = vmatprep.subr.mxu0 0.0
    %412 = vmatpush1.msra.mxu0 0.0
    %413 = vmatprep.subr.mxu0 0.0
    %414 = vmatpush1.msra.mxu0 0.0
    %415 = vmatprep.subr.mxu0 0.0
    %416 = vmatpush1.msra.mxu0 0.0
    %417 = vmatprep.subr.mxu0 0.0
    %418 = vmatpush1.msra.mxu0 0.0
    %419 = vmatprep.subr.mxu0 0.0
    %420 = vmatpush1.msra.mxu0 0.0
    %421 = vmatprep.subr.mxu0 %v172
    %422 = vmatpush1.msra.mxu0 %v171
    %423 = vmatprep.subr.mxu0 %v170
    %424 = vmatpush1.msra.mxu0 %v169
    %425 = vmatprep.subr.mxu0 %v168
    %426 = vmatpush1.msra.mxu0 %v167
    %427 = vmatprep.subr.mxu0 %v166
    %428 = vmatpush1.msra.mxu0 %v165
    %429 = vmatprep.subr.mxu0 %v164
    %430 = vmatpush1.msra.mxu0 %v163
    %431 = vmatprep.subr.mxu0 %v162
    %432 = vmatpush1.msra.mxu0 %v161
    %433 = vmatprep.subr.mxu0 %v160
    %434 = vmatpush1.msra.mxu0 %v159
    %435 = vmatprep.subr.mxu0 %v158
    %436 = vmatpush1.msra.mxu0 %v157
    %437 = vmatprep.subr.mxu0 0.0
    %438 = vmatpush2.msra.mxu0 0.0
    %439 = vmatprep.subr.mxu0 0.0
    %440 = vmatpush2.msra.mxu0 0.0
    %441 = vmatprep.subr.mxu0 0.0
    %442 = vmatpush2.msra.mxu0 0.0
    %443 = vmatprep.subr.mxu0 0.0
    %444 = vmatpush2.msra.mxu0 0.0
    %445 = vmatprep.subr.mxu0 0.0
    %446 = vmatpush2.msra.mxu0 0.0
    %447 = vmatprep.subr.mxu0 0.0
    %448 = vmatpush2.msra.mxu0 0.0
    %449 = vmatprep.subr.mxu0 0.0
    %450 = vmatpush2.msra.mxu0 0.0
    %451 = vmatprep.subr.mxu0 0.0
    %452 = vmatpush2.msra.mxu0 0.0
    %453 = vmatprep.subr.mxu0 0.0
    %454 = vmatpush2.msra.mxu0 0.0
    %455 = vmatprep.subr.mxu0 0.0
    %456 = vmatpush2.msra.mxu0 0.0
    %457 = vmatprep.subr.mxu0 0.0
    %458 = vmatpush2.msra.mxu0 0.0
    %459 = vmatprep.subr.mxu0 0.0
    %460 = vmatpush2.msra.mxu0 0.0
    %461 = vmatprep.subr.mxu0 0.0
    %462 = vmatpush2.msra.mxu0 0.0
    %463 = vmatprep.subr.mxu0 0.0
    %464 = vmatpush2.msra.mxu0 0.0
    %465 = vmatprep.subr.mxu0 0.0
    %466 = vmatpush2.msra.mxu0 0.0
    %467 = vmatprep.subr.mxu0 0.0
    %468 = vmatpush2.msra.mxu0 0.0
    %469 = vmatprep.mubr.f32.mxu0 0.0
    %470 = vmatmul.mubr.f32.gmra.mxu0 %v403
    %v471 = vpop.f32.mrf.mxu0
    %v472 = vadd.f32 0.0, %v471
    %v473 = vpop.f32.mrf.mxu0
    %v474 = vadd.f32 0.0, %v473
    %475 = vdwg.mxu0
    %v476 = vadd.f32 %v141, %v472
    %v477 = vadd.f32 %v143, %v474
    %v478 = vxor.u32 %v476, 2147483648
    %v479 = vxor.u32 %v477, 2147483648
    %v480 = vmul.f32 %v478, 1.442695
    %v481 = vpow.pop %v480
    %v482 = vmul.f32 %v479, 1.442695
    %v483 = vpow.pop %v482
    %v484 = vadd.f32 %v481, 1.0
    %v485 = vadd.f32 %v483, 1.0
    %v486 = vrcp.pop %v484
    %v487 = vmul.f32 1.0, %v486
    %v488 = vrcp.pop %v485
    %v489 = vmul.f32 1.0, %v488
    %v490 = vmul.f32 %v489, 2.0
    %v491 = vsub.f32 %v490, 1.0
    %v493 = vrot.slane %v388, 4
    %v495 = vmul.f32 %v487, %v493
    %v496 = vmul.f32 %v487, %v491
    %498 = vrot.lane.b32.xlu0 %v496, 64
    %v499 = vpop.permute.xlu0 %498
    %v501 = vadd.f32 %v495, %v499
    %v502 = vmul.f32 %v501, 2.0
    %v503 = vxor.u32 %v502, 2147483648
    %v504 = vmul.f32 %v503, 1.442695
    %v505 = vpow.pop %v504
    %v506 = vadd.f32 %v505, 1.0
    %v507 = vrcp.pop %v506
    %v508 = vmul.f32 1.0, %v507
    %v509 = vmul.f32 %v508, 2.0
    %v510 = vsub.f32 %v509, 1.0
    %v511 = vmul.f32 %v489, %v510
    %513 = vrot.lane.b32.xlu0 %v511, 64
    %v514 = vpop.permute.xlu0 %513
    %v515 = vsel %vm173, %v514, 0
    %517 = vmatprep.subr.mxu0 0.0
    %518 = vmatpush1.msra.mxu0 0.0
    %519 = vmatprep.subr.mxu0 0.0
    %520 = vmatpush1.msra.mxu0 0.0
    %521 = vmatprep.subr.mxu0 0.0
    %522 = vmatpush1.msra.mxu0 0.0
    %523 = vmatprep.subr.mxu0 0.0
    %524 = vmatpush1.msra.mxu0 0.0
    %525 = vmatprep.subr.mxu0 0.0
    %526 = vmatpush1.msra.mxu0 0.0
    %527 = vmatprep.subr.mxu0 0.0
    %528 = vmatpush1.msra.mxu0 0.0
    %529 = vmatprep.subr.mxu0 0.0
    %530 = vmatpush1.msra.mxu0 0.0
    %531 = vmatprep.subr.mxu0 0.0
    %532 = vmatpush1.msra.mxu0 0.0
    %533 = vmatprep.subr.mxu0 %v172
    %534 = vmatpush1.msra.mxu0 %v171
    %535 = vmatprep.subr.mxu0 %v170
    %536 = vmatpush1.msra.mxu0 %v169
    %537 = vmatprep.subr.mxu0 %v168
    %538 = vmatpush1.msra.mxu0 %v167
    %539 = vmatprep.subr.mxu0 %v166
    %540 = vmatpush1.msra.mxu0 %v165
    %541 = vmatprep.subr.mxu0 %v164
    %542 = vmatpush1.msra.mxu0 %v163
    %543 = vmatprep.subr.mxu0 %v162
    %544 = vmatpush1.msra.mxu0 %v161
    %545 = vmatprep.subr.mxu0 %v160
    %546 = vmatpush1.msra.mxu0 %v159
    %547 = vmatprep.subr.mxu0 %v158
    %548 = vmatpush1.msra.mxu0 %v157
    %549 = vmatprep.subr.mxu0 0.0
    %550 = vmatpush2.msra.mxu0 0.0
    %551 = vmatprep.subr.mxu0 0.0
    %552 = vmatpush2.msra.mxu0 0.0
    %553 = vmatprep.subr.mxu0 0.0
    %554 = vmatpush2.msra.mxu0 0.0
    %555 = vmatprep.subr.mxu0 0.0
    %556 = vmatpush2.msra.mxu0 0.0
    %557 = vmatprep.subr.mxu0 0.0
    %558 = vmatpush2.msra.mxu0 0.0
    %559 = vmatprep.subr.mxu0 0.0
    %560 = vmatpush2.msra.mxu0 0.0
    %561 = vmatprep.subr.mxu0 0.0
    %562 = vmatpush2.msra.mxu0 0.0
    %563 = vmatprep.subr.mxu0 0.0
    %564 = vmatpush2.msra.mxu0 0.0
    %565 = vmatprep.subr.mxu0 0.0
    %566 = vmatpush2.msra.mxu0 0.0
    %567 = vmatprep.subr.mxu0 0.0
    %568 = vmatpush2.msra.mxu0 0.0
    %569 = vmatprep.subr.mxu0 0.0
    %570 = vmatpush2.msra.mxu0 0.0
    %571 = vmatprep.subr.mxu0 0.0
    %572 = vmatpush2.msra.mxu0 0.0
    %573 = vmatprep.subr.mxu0 0.0
    %574 = vmatpush2.msra.mxu0 0.0
    %575 = vmatprep.subr.mxu0 0.0
    %576 = vmatpush2.msra.mxu0 0.0
    %577 = vmatprep.subr.mxu0 0.0
    %578 = vmatpush2.msra.mxu0 0.0
    %579 = vmatprep.subr.mxu0 0.0
    %580 = vmatpush2.msra.mxu0 0.0
    %581 = vmatprep.mubr.f32.mxu0 0.0
    %582 = vmatmul.mubr.f32.gmra.mxu0 %v515
    %v583 = vpop.f32.mrf.mxu0
    %v584 = vadd.f32 0.0, %v583
    %v585 = vpop.f32.mrf.mxu0
    %v586 = vadd.f32 0.0, %v585
    %587 = vdwg.mxu0
    %v590 = vrot.slane %v584, 4
    %v591 = vrot.slane %v586, 4
    %v594 = vadd.f32 %v141, %v590
    %v595 = vadd.f32 %v143, %v591
    %v596 = vxor.u32 %v594, 2147483648
    %v597 = vxor.u32 %v595, 2147483648
    %v598 = vmul.f32 %v596, 1.442695
    %v599 = vpow.pop %v598
    %v600 = vmul.f32 %v597, 1.442695
    %v601 = vpow.pop %v600
    %v602 = vadd.f32 %v599, 1.0
    %v603 = vadd.f32 %v601, 1.0
    %v604 = vrcp.pop %v602
    %v605 = vmul.f32 1.0, %v604
    %v606 = vrcp.pop %v603
    %v607 = vmul.f32 1.0, %v606
    %v608 = vmul.f32 %v607, 2.0
    %v609 = vsub.f32 %v608, 1.0
    %v611 = vrot.slane %v501, 4
    %v613 = vmul.f32 %v605, %v611
    %v614 = vmul.f32 %v605, %v609
    %616 = vrot.lane.b32.xlu0 %v614, 64
    %v617 = vpop.permute.xlu0 %616
    %v619 = vadd.f32 %v613, %v617
    %v620 = vmul.f32 %v619, 2.0
    %v621 = vxor.u32 %v620, 2147483648
    %v622 = vmul.f32 %v621, 1.442695
    %v623 = vpow.pop %v622
    %v624 = vadd.f32 %v623, 1.0
    %v625 = vrcp.pop %v624
    %v626 = vmul.f32 1.0, %v625
    %v627 = vmul.f32 %v626, 2.0
    %v628 = vsub.f32 %v627, 1.0
    %v629 = vmul.f32 %v607, %v628
    %v631 = vrot.slane %v629, 4
    %632 = vrot.lane.b32.xlu0 %v631, 64
    %v633 = vpop.permute.xlu0 %632
    %v634 = vsel %vm173, %v633, 0
    %636 = vmatprep.subr.mxu0 0.0
    %637 = vmatpush1.msra.mxu0 0.0
    %638 = vmatprep.subr.mxu0 0.0
    %639 = vmatpush1.msra.mxu0 0.0
    %640 = vmatprep.subr.mxu0 0.0
    %641 = vmatpush1.msra.mxu0 0.0
    %642 = vmatprep.subr.mxu0 0.0
    %643 = vmatpush1.msra.mxu0 0.0
    %644 = vmatprep.subr.mxu0 0.0
    %645 = vmatpush1.msra.mxu0 0.0
    %646 = vmatprep.subr.mxu0 0.0
    %647 = vmatpush1.msra.mxu0 0.0
    %648 = vmatprep.subr.mxu0 0.0
    %649 = vmatpush1.msra.mxu0 0.0
    %650 = vmatprep.subr.mxu0 0.0
    %651 = vmatpush1.msra.mxu0 0.0
    %652 = vmatprep.subr.mxu0 %v172
    %653 = vmatpush1.msra.mxu0 %v171
    %654 = vmatprep.subr.mxu0 %v170
    %655 = vmatpush1.msra.mxu0 %v169
    %656 = vmatprep.subr.mxu0 %v168
    %657 = vmatpush1.msra.mxu0 %v167
    %658 = vmatprep.subr.mxu0 %v166
    %659 = vmatpush1.msra.mxu0 %v165
    %660 = vmatprep.subr.mxu0 %v164
    %661 = vmatpush1.msra.mxu0 %v163
    %662 = vmatprep.subr.mxu0 %v162
    %663 = vmatpush1.msra.mxu0 %v161
    %664 = vmatprep.subr.mxu0 %v160
    %665 = vmatpush1.msra.mxu0 %v159
    %666 = vmatprep.subr.mxu0 %v158
    %667 = vmatpush1.msra.mxu0 %v157
    %668 = vmatprep.subr.mxu0 0.0
    %669 = vmatpush2.msra.mxu0 0.0
    %670 = vmatprep.subr.mxu0 0.0
    %671 = vmatpush2.msra.mxu0 0.0
    %672 = vmatprep.subr.mxu0 0.0
    %673 = vmatpush2.msra.mxu0 0.0
    %674 = vmatprep.subr.mxu0 0.0
    %675 = vmatpush2.msra.mxu0 0.0
    %676 = vmatprep.subr.mxu0 0.0
    %677 = vmatpush2.msra.mxu0 0.0
    %678 = vmatprep.subr.mxu0 0.0
    %679 = vmatpush2.msra.mxu0 0.0
    %680 = vmatprep.subr.mxu0 0.0
    %681 = vmatpush2.msra.mxu0 0.0
    %682 = vmatprep.subr.mxu0 0.0
    %683 = vmatpush2.msra.mxu0 0.0
    %684 = vmatprep.subr.mxu0 0.0
    %685 = vmatpush2.msra.mxu0 0.0
    %686 = vmatprep.subr.mxu0 0.0
    %687 = vmatpush2.msra.mxu0 0.0
    %688 = vmatprep.subr.mxu0 0.0
    %689 = vmatpush2.msra.mxu0 0.0
    %690 = vmatprep.subr.mxu0 0.0
    %691 = vmatpush2.msra.mxu0 0.0
    %692 = vmatprep.subr.mxu0 0.0
    %693 = vmatpush2.msra.mxu0 0.0
    %694 = vmatprep.subr.mxu0 0.0
    %695 = vmatpush2.msra.mxu0 0.0
    %696 = vmatprep.subr.mxu0 0.0
    %697 = vmatpush2.msra.mxu0 0.0
    %698 = vmatprep.subr.mxu0 0.0
    %699 = vmatpush2.msra.mxu0 0.0
    %700 = vmatprep.mubr.f32.mxu0 0.0
    %701 = vmatmul.mubr.f32.gmra.mxu0 %v634
    %v702 = vpop.f32.mrf.mxu0
    %v703 = vadd.f32 0.0, %v702
    %v704 = vpop.f32.mrf.mxu0
    %v705 = vadd.f32 0.0, %v704
    %706 = vdwg.mxu0
    %v707 = vadd.f32 %v147, %v703
    %v708 = vadd.f32 %v149, %v705
    %v709 = vxor.u32 %v707, 2147483648
    %v710 = vxor.u32 %v708, 2147483648
    %v711 = vmul.f32 %v709, 1.442695
    %v712 = vpow.pop %v711
    %v713 = vmul.f32 %v710, 1.442695
    %v714 = vpow.pop %v713
    %v715 = vadd.f32 %v712, 1.0
    %v716 = vadd.f32 %v714, 1.0
    %v717 = vrcp.pop %v715
    %v718 = vmul.f32 1.0, %v717
    %v719 = vrcp.pop %v716
    %v720 = vmul.f32 1.0, %v719
    %v721 = vmul.f32 %v720, 2.0
    %v722 = vsub.f32 %v721, 1.0
    %v724 = vrot.slane %v619, 4
    %v726 = vmul.f32 %v718, %v724
    %v727 = vmul.f32 %v718, %v722
    %729 = vrot.lane.b32.xlu0 %v727, 64
    %v730 = vpop.permute.xlu0 %729
    %v732 = vadd.f32 %v726, %v730
    %v733 = vmul.f32 %v732, 2.0
    %v734 = vxor.u32 %v733, 2147483648
    %v735 = vmul.f32 %v734, 1.442695
    %v736 = vpow.pop %v735
    %v737 = vadd.f32 %v736, 1.0
    %v738 = vrcp.pop %v737
    %v739 = vmul.f32 1.0, %v738
    %v740 = vmul.f32 %v739, 2.0
    %v741 = vsub.f32 %v740, 1.0
    %v742 = vmul.f32 %v720, %v741
    %744 = vrot.lane.b32.xlu0 %v742, 64
    %v745 = vpop.permute.xlu0 %744
    %v746 = vsel %vm173, %v745, 0
    %748 = vmatprep.subr.mxu0 0.0
    %749 = vmatpush1.msra.mxu0 0.0
    %750 = vmatprep.subr.mxu0 0.0
    %751 = vmatpush1.msra.mxu0 0.0
    %752 = vmatprep.subr.mxu0 0.0
    %753 = vmatpush1.msra.mxu0 0.0
    %754 = vmatprep.subr.mxu0 0.0
    %755 = vmatpush1.msra.mxu0 0.0
    %756 = vmatprep.subr.mxu0 0.0
    %757 = vmatpush1.msra.mxu0 0.0
    %758 = vmatprep.subr.mxu0 0.0
    %759 = vmatpush1.msra.mxu0 0.0
    %760 = vmatprep.subr.mxu0 0.0
    %761 = vmatpush1.msra.mxu0 0.0
    %762 = vmatprep.subr.mxu0 0.0
    %763 = vmatpush1.msra.mxu0 0.0
    %764 = vmatprep.subr.mxu0 %v172
    %765 = vmatpush1.msra.mxu0 %v171
    %766 = vmatprep.subr.mxu0 %v170
    %767 = vmatpush1.msra.mxu0 %v169
    %768 = vmatprep.subr.mxu0 %v168
    %769 = vmatpush1.msra.mxu0 %v167
    %770 = vmatprep.subr.mxu0 %v166
    %771 = vmatpush1.msra.mxu0 %v165
    %772 = vmatprep.subr.mxu0 %v164
    %773 = vmatpush1.msra.mxu0 %v163
    %774 = vmatprep.subr.mxu0 %v162
    %775 = vmatpush1.msra.mxu0 %v161
    %776 = vmatprep.subr.mxu0 %v160
    %777 = vmatpush1.msra.mxu0 %v159
    %778 = vmatprep.subr.mxu0 %v158
    %779 = vmatpush1.msra.mxu0 %v157
    %780 = vmatprep.subr.mxu0 0.0
    %781 = vmatpush2.msra.mxu0 0.0
    %782 = vmatprep.subr.mxu0 0.0
    %783 = vmatpush2.msra.mxu0 0.0
    %784 = vmatprep.subr.mxu0 0.0
    %785 = vmatpush2.msra.mxu0 0.0
    %786 = vmatprep.subr.mxu0 0.0
    %787 = vmatpush2.msra.mxu0 0.0
    %788 = vmatprep.subr.mxu0 0.0
    %789 = vmatpush2.msra.mxu0 0.0
    %790 = vmatprep.subr.mxu0 0.0
    %791 = vmatpush2.msra.mxu0 0.0
    %792 = vmatprep.subr.mxu0 0.0
    %793 = vmatpush2.msra.mxu0 0.0
    %794 = vmatprep.subr.mxu0 0.0
    %795 = vmatpush2.msra.mxu0 0.0
    %796 = vmatprep.subr.mxu0 0.0
    %797 = vmatpush2.msra.mxu0 0.0
    %798 = vmatprep.subr.mxu0 0.0
    %799 = vmatpush2.msra.mxu0 0.0
    %800 = vmatprep.subr.mxu0 0.0
    %801 = vmatpush2.msra.mxu0 0.0
    %802 = vmatprep.subr.mxu0 0.0
    %803 = vmatpush2.msra.mxu0 0.0
    %804 = vmatprep.subr.mxu0 0.0
    %805 = vmatpush2.msra.mxu0 0.0
    %806 = vmatprep.subr.mxu0 0.0
    %807 = vmatpush2.msra.mxu0 0.0
    %808 = vmatprep.subr.mxu0 0.0
    %809 = vmatpush2.msra.mxu0 0.0
    %810 = vmatprep.subr.mxu0 0.0
    %811 = vmatpush2.msra.mxu0 0.0
    %812 = vmatprep.mubr.f32.mxu0 0.0
    %813 = vmatmul.mubr.f32.gmra.mxu0 %v746
    %v814 = vpop.f32.mrf.mxu0
    %v815 = vadd.f32 0.0, %v814
    %v816 = vpop.f32.mrf.mxu0
    %v817 = vadd.f32 0.0, %v816
    %818 = vdwg.mxu0
    %v821 = vrot.slane %v815, 4
    %v822 = vrot.slane %v817, 4
    %v825 = vadd.f32 %v147, %v821
    %v826 = vadd.f32 %v149, %v822
    %v827 = vxor.u32 %v825, 2147483648
    %v828 = vxor.u32 %v826, 2147483648
    %v829 = vmul.f32 %v827, 1.442695
    %v830 = vpow.pop %v829
    %v831 = vmul.f32 %v828, 1.442695
    %v832 = vpow.pop %v831
    %v833 = vadd.f32 %v830, 1.0
    %v834 = vadd.f32 %v832, 1.0
    %v835 = vrcp.pop %v833
    %v836 = vmul.f32 1.0, %v835
    %v837 = vrcp.pop %v834
    %v838 = vmul.f32 1.0, %v837
    %v839 = vmul.f32 %v838, 2.0
    %v840 = vsub.f32 %v839, 1.0
    %v842 = vrot.slane %v732, 4
    %v844 = vmul.f32 %v836, %v842
    %v845 = vmul.f32 %v836, %v840
    %847 = vrot.lane.b32.xlu0 %v845, 64
    %v848 = vpop.permute.xlu0 %847
    %v850 = vadd.f32 %v844, %v848
    %v851 = vmul.f32 %v850, 2.0
    %v852 = vxor.u32 %v851, 2147483648
    %v853 = vmul.f32 %v852, 1.442695
    %v854 = vpow.pop %v853
    %v855 = vadd.f32 %v854, 1.0
    %v856 = vrcp.pop %v855
    %v857 = vmul.f32 1.0, %v856
    %v858 = vmul.f32 %v857, 2.0
    %v859 = vsub.f32 %v858, 1.0
    %v860 = vmul.f32 %v838, %v859
    %v862 = vrot.slane %v860, 4
    %863 = vrot.lane.b32.xlu0 %v862, 64
    %v864 = vpop.permute.xlu0 %863
    %v865 = vsel %vm173, %v864, 0
    %867 = vmatprep.subr.mxu0 0.0
    %868 = vmatpush1.msra.mxu0 0.0
    %869 = vmatprep.subr.mxu0 0.0
    %870 = vmatpush1.msra.mxu0 0.0
    %871 = vmatprep.subr.mxu0 0.0
    %872 = vmatpush1.msra.mxu0 0.0
    %873 = vmatprep.subr.mxu0 0.0
    %874 = vmatpush1.msra.mxu0 0.0
    %875 = vmatprep.subr.mxu0 0.0
    %876 = vmatpush1.msra.mxu0 0.0
    %877 = vmatprep.subr.mxu0 0.0
    %878 = vmatpush1.msra.mxu0 0.0
    %879 = vmatprep.subr.mxu0 0.0
    %880 = vmatpush1.msra.mxu0 0.0
    %881 = vmatprep.subr.mxu0 0.0
    %882 = vmatpush1.msra.mxu0 0.0
    %883 = vmatprep.subr.mxu0 %v172
    %884 = vmatpush1.msra.mxu0 %v171
    %885 = vmatprep.subr.mxu0 %v170
    %886 = vmatpush1.msra.mxu0 %v169
    %887 = vmatprep.subr.mxu0 %v168
    %888 = vmatpush1.msra.mxu0 %v167
    %889 = vmatprep.subr.mxu0 %v166
    %890 = vmatpush1.msra.mxu0 %v165
    %891 = vmatprep.subr.mxu0 %v164
    %892 = vmatpush1.msra.mxu0 %v163
    %893 = vmatprep.subr.mxu0 %v162
    %894 = vmatpush1.msra.mxu0 %v161
    %895 = vmatprep.subr.mxu0 %v160
    %896 = vmatpush1.msra.mxu0 %v159
    %897 = vmatprep.subr.mxu0 %v158
    %898 = vmatpush1.msra.mxu0 %v157
    %899 = vmatprep.subr.mxu0 0.0
    %900 = vmatpush2.msra.mxu0 0.0
    %901 = vmatprep.subr.mxu0 0.0
    %902 = vmatpush2.msra.mxu0 0.0
    %903 = vmatprep.subr.mxu0 0.0
    %904 = vmatpush2.msra.mxu0 0.0
    %905 = vmatprep.subr.mxu0 0.0
    %906 = vmatpush2.msra.mxu0 0.0
    %907 = vmatprep.subr.mxu0 0.0
    %908 = vmatpush2.msra.mxu0 0.0
    %909 = vmatprep.subr.mxu0 0.0
    %910 = vmatpush2.msra.mxu0 0.0
    %911 = vmatprep.subr.mxu0 0.0
    %912 = vmatpush2.msra.mxu0 0.0
    %913 = vmatprep.subr.mxu0 0.0
    %914 = vmatpush2.msra.mxu0 0.0
    %915 = vmatprep.subr.mxu0 0.0
    %916 = vmatpush2.msra.mxu0 0.0
    %917 = vmatprep.subr.mxu0 0.0
    %918 = vmatpush2.msra.mxu0 0.0
    %919 = vmatprep.subr.mxu0 0.0
    %920 = vmatpush2.msra.mxu0 0.0
    %921 = vmatprep.subr.mxu0 0.0
    %922 = vmatpush2.msra.mxu0 0.0
    %923 = vmatprep.subr.mxu0 0.0
    %924 = vmatpush2.msra.mxu0 0.0
    %925 = vmatprep.subr.mxu0 0.0
    %926 = vmatpush2.msra.mxu0 0.0
    %927 = vmatprep.subr.mxu0 0.0
    %928 = vmatpush2.msra.mxu0 0.0
    %929 = vmatprep.subr.mxu0 0.0
    %930 = vmatpush2.msra.mxu0 0.0
    %931 = vmatprep.mubr.f32.mxu0 0.0
    %932 = vmatmul.mubr.f32.gmra.mxu0 %v865
    %v933 = vpop.f32.mrf.mxu0
    %v934 = vadd.f32 0.0, %v933
    %v935 = vpop.f32.mrf.mxu0
    %v936 = vadd.f32 0.0, %v935
    %937 = vdwg.mxu0
    %v938 = vadd.f32 %v153, %v934
    %v939 = vadd.f32 %v155, %v936
    %v940 = vxor.u32 %v938, 2147483648
    %v941 = vxor.u32 %v939, 2147483648
    %v942 = vmul.f32 %v940, 1.442695
    %v943 = vpow.pop %v942
    %v944 = vmul.f32 %v941, 1.442695
    %v945 = vpow.pop %v944
    %v946 = vadd.f32 %v943, 1.0
    %v947 = vadd.f32 %v945, 1.0
    %v948 = vrcp.pop %v946
    %v949 = vmul.f32 1.0, %v948
    %v950 = vrcp.pop %v947
    %v951 = vmul.f32 1.0, %v950
    %v952 = vmul.f32 %v951, 2.0
    %v953 = vsub.f32 %v952, 1.0
    %v955 = vrot.slane %v850, 4
    %v957 = vmul.f32 %v949, %v955
    %v958 = vmul.f32 %v949, %v953
    %960 = vrot.lane.b32.xlu0 %v958, 64
    %v961 = vpop.permute.xlu0 %960
    %v963 = vadd.f32 %v957, %v961
    %v964 = vmul.f32 %v963, 2.0
    %v965 = vxor.u32 %v964, 2147483648
    %v966 = vmul.f32 %v965, 1.442695
    %v967 = vpow.pop %v966
    %v968 = vadd.f32 %v967, 1.0
    %v969 = vrcp.pop %v968
    %v970 = vmul.f32 1.0, %v969
    %v971 = vmul.f32 %v970, 2.0
    %v972 = vsub.f32 %v971, 1.0
    %v973 = vmul.f32 %v951, %v972
    %975 = vrot.lane.b32.xlu0 %v973, 64
    %v976 = vpop.permute.xlu0 %975
    %v977 = vsel %vm173, %v976, 0
    %979 = vmatprep.subr.mxu0 0.0
    %980 = vmatpush1.msra.mxu0 0.0
    %981 = vmatprep.subr.mxu0 0.0
    %982 = vmatpush1.msra.mxu0 0.0
    %983 = vmatprep.subr.mxu0 0.0
    %984 = vmatpush1.msra.mxu0 0.0
    %985 = vmatprep.subr.mxu0 0.0
    %986 = vmatpush1.msra.mxu0 0.0
    %987 = vmatprep.subr.mxu0 0.0
    %988 = vmatpush1.msra.mxu0 0.0
    %989 = vmatprep.subr.mxu0 0.0
    %990 = vmatpush1.msra.mxu0 0.0
    %991 = vmatprep.subr.mxu0 0.0
    %992 = vmatpush1.msra.mxu0 0.0
    %993 = vmatprep.subr.mxu0 0.0
    %994 = vmatpush1.msra.mxu0 0.0
    %995 = vmatprep.subr.mxu0 %v172
    %996 = vmatpush1.msra.mxu0 %v171
    %997 = vmatprep.subr.mxu0 %v170
    %998 = vmatpush1.msra.mxu0 %v169
    %999 = vmatprep.subr.mxu0 %v168
    %1000 = vmatpush1.msra.mxu0 %v167
    %1001 = vmatprep.subr.mxu0 %v166
    %1002 = vmatpush1.msra.mxu0 %v165
    %1003 = vmatprep.subr.mxu0 %v164
    %1004 = vmatpush1.msra.mxu0 %v163
    %1005 = vmatprep.subr.mxu0 %v162
    %1006 = vmatpush1.msra.mxu0 %v161
    %1007 = vmatprep.subr.mxu0 %v160
    %1008 = vmatpush1.msra.mxu0 %v159
    %1009 = vmatprep.subr.mxu0 %v158
    %1010 = vmatpush1.msra.mxu0 %v157
    %1011 = vmatprep.subr.mxu0 0.0
    %1012 = vmatpush2.msra.mxu0 0.0
    %1013 = vmatprep.subr.mxu0 0.0
    %1014 = vmatpush2.msra.mxu0 0.0
    %1015 = vmatprep.subr.mxu0 0.0
    %1016 = vmatpush2.msra.mxu0 0.0
    %1017 = vmatprep.subr.mxu0 0.0
    %1018 = vmatpush2.msra.mxu0 0.0
    %1019 = vmatprep.subr.mxu0 0.0
    %1020 = vmatpush2.msra.mxu0 0.0
    %1021 = vmatprep.subr.mxu0 0.0
    %1022 = vmatpush2.msra.mxu0 0.0
    %1023 = vmatprep.subr.mxu0 0.0
    %1024 = vmatpush2.msra.mxu0 0.0
    %1025 = vmatprep.subr.mxu0 0.0
    %1026 = vmatpush2.msra.mxu0 0.0
    %1027 = vmatprep.subr.mxu0 0.0
    %1028 = vmatpush2.msra.mxu0 0.0
    %1029 = vmatprep.subr.mxu0 0.0
    %1030 = vmatpush2.msra.mxu0 0.0
    %1031 = vmatprep.subr.mxu0 0.0
    %1032 = vmatpush2.msra.mxu0 0.0
    %1033 = vmatprep.subr.mxu0 0.0
    %1034 = vmatpush2.msra.mxu0 0.0
    %1035 = vmatprep.subr.mxu0 0.0
    %1036 = vmatpush2.msra.mxu0 0.0
    %1037 = vmatprep.subr.mxu0 0.0
    %1038 = vmatpush2.msra.mxu0 0.0
    %1039 = vmatprep.subr.mxu0 0.0
    %1040 = vmatpush2.msra.mxu0 0.0
    %1041 = vmatprep.subr.mxu0 0.0
    %1042 = vmatpush2.msra.mxu0 0.0
    %1043 = vmatprep.mubr.f32.mxu0 0.0
    %1044 = vmatmul.mubr.f32.gmra.mxu0 %v977
    %v1045 = vpop.f32.mrf.mxu0
    %v1046 = vadd.f32 0.0, %v1045
    %v1047 = vpop.f32.mrf.mxu0
    %v1048 = vadd.f32 0.0, %v1047
    %1049 = vdwg.mxu0
    %v1052 = vrot.slane %v1046, 4
    %v1053 = vrot.slane %v1048, 4
    %v1056 = vadd.f32 %v153, %v1052
    %v1057 = vadd.f32 %v155, %v1053
    %v1058 = vxor.u32 %v1056, 2147483648
    %v1059 = vxor.u32 %v1057, 2147483648
    %v1060 = vmul.f32 %v1058, 1.442695
    %v1061 = vpow.pop %v1060
    %v1062 = vmul.f32 %v1059, 1.442695
    %v1063 = vpow.pop %v1062
    %v1064 = vadd.f32 %v1061, 1.0
    %v1065 = vadd.f32 %v1063, 1.0
    %v1066 = vrcp.pop %v1064
    %v1067 = vmul.f32 1.0, %v1066
    %v1068 = vrcp.pop %v1065
    %v1069 = vmul.f32 1.0, %v1068
    %v1070 = vmul.f32 %v1069, 2.0
    %v1071 = vsub.f32 %v1070, 1.0
    %v1073 = vrot.slane %v963, 4
    %v1075 = vmul.f32 %v1067, %v1073
    %v1076 = vmul.f32 %v1067, %v1071
    %1078 = vrot.lane.b32.xlu0 %v1076, 64
    %v1079 = vpop.permute.xlu0 %1078
    %v1081 = vadd.f32 %v1075, %v1079
    %v1082 = vmul.f32 %v1081, 2.0
    %v1083 = vxor.u32 %v1082, 2147483648
    %v1084 = vmul.f32 %v1083, 1.442695
    %v1085 = vpow.pop %v1084
    %v1086 = vadd.f32 %v1085, 1.0
    %v1087 = vrcp.pop %v1086
    %v1088 = vmul.f32 1.0, %v1087
    %v1089 = vmul.f32 %v1088, 2.0
    %v1090 = vsub.f32 %v1089, 1.0
    %v1091 = vmul.f32 %v1069, %v1090
    %v1092 = vld [vmem:[%s4] sm:$0xff]
    %v1093 = vld [vmem:[%s4 + $0x8] sm:$0xff]
    %v1094 = vld [vmem:[%s4 + $0x10] sm:$0xff]
    %v1095 = vld [vmem:[%s4 + $0x18] sm:$0xff]
    %v1096 = vld [vmem:[%s4 + $0x20] sm:$0xff]
    %v1097 = vld [vmem:[%s4 + $0x28] sm:$0xff]
    %v1098 = vld [vmem:[%s4 + $0x30] sm:$0xff]
    %v1099 = vld [vmem:[%s4 + $0x38] sm:$0xff]
    %v1100 = vld [vmem:[%s5] sm:$0x1]
    %v1102 = vlaneseq
    %v1103 = vshrl.u32 %v1102, 7
    %v1104 = vsub.s32 0, %v1103
    %v1105 = vrot.slane %v1100, %v1104
    %v1108 = vrot.slane %v1091, 4
    %1109 = vrot.lane.b32.xlu0 %v1108, 64
    %v1110 = vpop.permute.xlu0 %1109
    %v1111 = vsel %vm173, %v1110, 0
    %1113 = vmatprep.subr.mxu0 0.0
    %1114 = vmatpush1.msra.mxu0 0.0
    %1115 = vmatprep.subr.mxu0 0.0
    %1116 = vmatpush1.msra.mxu0 0.0
    %1117 = vmatprep.subr.mxu0 0.0
    %1118 = vmatpush1.msra.mxu0 0.0
    %1119 = vmatprep.subr.mxu0 0.0
    %1120 = vmatpush1.msra.mxu0 0.0
    %1121 = vmatprep.subr.mxu0 0.0
    %1122 = vmatpush1.msra.mxu0 0.0
    %1123 = vmatprep.subr.mxu0 0.0
    %1124 = vmatpush1.msra.mxu0 0.0
    %1125 = vmatprep.subr.mxu0 0.0
    %1126 = vmatpush1.msra.mxu0 0.0
    %1127 = vmatprep.subr.mxu0 0.0
    %1128 = vmatpush1.msra.mxu0 0.0
    %1129 = vmatprep.subr.mxu0 0.0
    %1130 = vmatpush1.msra.mxu0 %v1099
    %1131 = vmatprep.subr.mxu0 0.0
    %1132 = vmatpush1.msra.mxu0 %v1098
    %1133 = vmatprep.subr.mxu0 0.0
    %1134 = vmatpush1.msra.mxu0 %v1097
    %1135 = vmatprep.subr.mxu0 0.0
    %1136 = vmatpush1.msra.mxu0 %v1096
    %1137 = vmatprep.subr.mxu0 0.0
    %1138 = vmatpush1.msra.mxu0 %v1095
    %1139 = vmatprep.subr.mxu0 0.0
    %1140 = vmatpush1.msra.mxu0 %v1094
    %1141 = vmatprep.subr.mxu0 0.0
    %1142 = vmatpush1.msra.mxu0 %v1093
    %1143 = vmatprep.subr.mxu0 0.0
    %1144 = vmatpush1.msra.mxu0 %v1092
    %1145 = vmatprep.subr.mxu0 0.0
    %1146 = vmatpush2.msra.mxu0 0.0
    %1147 = vmatprep.subr.mxu0 0.0
    %1148 = vmatpush2.msra.mxu0 0.0
    %1149 = vmatprep.subr.mxu0 0.0
    %1150 = vmatpush2.msra.mxu0 0.0
    %1151 = vmatprep.subr.mxu0 0.0
    %1152 = vmatpush2.msra.mxu0 0.0
    %1153 = vmatprep.subr.mxu0 0.0
    %1154 = vmatpush2.msra.mxu0 0.0
    %1155 = vmatprep.subr.mxu0 0.0
    %1156 = vmatpush2.msra.mxu0 0.0
    %1157 = vmatprep.subr.mxu0 0.0
    %1158 = vmatpush2.msra.mxu0 0.0
    %1159 = vmatprep.subr.mxu0 0.0
    %1160 = vmatpush2.msra.mxu0 0.0
    %1161 = vmatprep.subr.mxu0 0.0
    %1162 = vmatpush2.msra.mxu0 0.0
    %1163 = vmatprep.subr.mxu0 0.0
    %1164 = vmatpush2.msra.mxu0 0.0
    %1165 = vmatprep.subr.mxu0 0.0
    %1166 = vmatpush2.msra.mxu0 0.0
    %1167 = vmatprep.subr.mxu0 0.0
    %1168 = vmatpush2.msra.mxu0 0.0
    %1169 = vmatprep.subr.mxu0 0.0
    %1170 = vmatpush2.msra.mxu0 0.0
    %1171 = vmatprep.subr.mxu0 0.0
    %1172 = vmatpush2.msra.mxu0 0.0
    %1173 = vmatprep.subr.mxu0 0.0
    %1174 = vmatpush2.msra.mxu0 0.0
    %1175 = vmatprep.subr.mxu0 0.0
    %1176 = vmatpush2.msra.mxu0 0.0
    %1177 = vmatprep.mubr.f32.mxu0 0.0
    %1178 = vmatmul.mubr.f32.gmra.mxu0 %v1111
    %v1179 = vpop.f32.mrf.mxu0
    %v1180 = vadd.f32 %v1105, %v1179
    %v1181 = vpop.f32.mrf.mxu0
    %1182 = vdwg.mxu0
    %vm1183 = vcmask 76800
    %1184 = vst.msk [vmem:[#allocation2] sm:$0xf] %vm1183, %v1180
    // Predicated region
    $region26: #{rnn_forward.1} parent=1 // pred_check
      _
    $region27: #{rnn_forward.1} parent=1 // pred_check_branch
      %1186 = sbr.rel (0) target = $region29
    $region28: #{rnn_forward.1} parent=1 // pred_region
      %s1188 = ssub.s32 64, 64
      %1189 = vsyncadd [#allocation3], %s1188
      %s1191 = sshll.u32 [#allocation2], 4
      %s1192 = int_to_ptr.vmem [resolvable:$true] %s1191
      %1194 = dma.vmem_to_hbm [thread:$0]  %s1192, 64, %s6, [#allocation3]
    $region29: #{rnn_forward.1} parent=1 // pred_fallthru
      _
    // Predicated region
    $region30: #{rnn_forward.1} parent=1 // pred_check
      _
    $region31: #{rnn_forward.1} parent=1 // pred_check_branch
      %1196 = sbr.rel (0) target = $region33
    $region32: #{rnn_forward.1} parent=1 // pred_region
      %1197 = dma.done [#allocation3], 64
    $region33: #{rnn_forward.1} parent=1 // pred_fallthru
      _
    %1198 = vsyncpa [#allocation3], 1

</llo_original>
